<compile_context>
chip_gen: v6e
topology: v6e:2x2x1
jax: 0.10.0
libtpu: 0.0.40
codegen_flags: <defaults>
</compile_context>

<pallas_src>
import math

import jax
import jax.numpy as jnp
from jax.experimental import pallas as pl
from jax.experimental.pallas import tpu as pltpu


def _pick_batch_per_step(n, hw, target_lanes=1024):
    """Largest divisor of n giving ~target_lanes of matmul lane width per grid
    step while keeping >=2 grid steps when n >= 2 (megacore / v7x)."""
    best = 1
    for d in range(1, n + 1):
        if n % d:
            continue
        if d * hw <= target_lanes and n // d >= min(2, n):
            best = d
    return best


def efm_forward(c_nchw, att_nchw, w_oihw, gamma, beta, rmean, rvar, w1d,
                eps=1e-5):
    """EFM forward. Inputs/outputs use PyTorch NCHW convention."""
    N, C, H, W = c_nchw.shape
    HW = H * W
    k = int(w1d.shape[0])
    pad1 = (k - 1) // 2

    # F.interpolate(att, c.shape[2:], mode='bilinear', align_corners=False)
    if att_nchw.shape != c_nchw.shape:
        att_nchw = jax.image.resize(
            att_nchw, (att_nchw.shape[0], att_nchw.shape[1], H, W),
            method="bilinear")

    # channels-first, flat-spatial, bf16 I/O (halves input DMA; the conv feeds
    # the MXU in bf16 anyway).  Trailing-dim reshape only -- no transposes.
    c2 = c_nchw.reshape(N, C, HW).astype(jnp.bfloat16)
    a2 = att_nchw.reshape(N, C, HW).astype(jnp.bfloat16)

    # fold BatchNorm (eval) into the conv: scale into the weight rows, only
    # the bias remains as a per-channel add in the kernel.
    inv_std = 1.0 / jnp.sqrt(rvar + eps)
    scale = gamma * inv_std                                     # (C,)
    bias = (beta - rmean * scale).reshape(C, 1).astype(jnp.float32)

    # conv weight packed per tap: w9[t, co, ci] = w[co, ci, dy, dx]*scale[co],
    # with t = dy*3 + dx  ->  nine accumulating dots, no im2col buffer.
    w9 = jnp.transpose(w_oihw, (2, 3, 0, 1)).reshape(9, C, C)
    w9 = (w9 * scale.reshape(1, C, 1)).astype(jnp.bfloat16)

    # column-validity pre-masks, applied once in f32 to x (source positions):
    #   dx==0 taps read a copy of x zeroed where col == W-1
    #   dx==2 taps read a copy of x zeroed where col == 0
    col = jnp.arange(HW, dtype=jnp.int32) % W
    masks = jnp.stack([col < W - 1, col > 0]).astype(jnp.float32)   # (2, HW)

    # Conv1d(1, 1, k) taps, shaped (k, 1) so the kernel reads 2-D blocks only
    w1k = w1d.reshape(k, 1).astype(jnp.float32)

    # lane geometry of the zero-padded x copies: padl is a 128-multiple that
    # covers the largest |tap offset| = W+1; it is also the inter-slab gap
    # when several batch elements are packed into one grid step.
    padl = -(-(W + 1) // 128) * 128
    NB = _pick_batch_per_step(N, HW)
    SLAB = HW + padl
    T = NB * HW + (NB - 1) * padl        # matmul lane width per step
    xz_w = padl + NB * SLAB              # padded-buffer lane width

    def kernel(c_ref, att_ref, w_ref, b_ref, m_ref, k_ref, o_ref,
               x1_ref, x0_ref, x2_ref, pp_ref):
        # --- zero the aligned border/gap strips of the three padded buffers.
        # Scratch is uninitialized and per-core; under "parallel" megacore
        # sharding there is no reliable first iteration, so re-zero each step.
        zpad = jnp.zeros((C, padl), jnp.bfloat16)
        for g in range(NB + 1):
            gs = g * SLAB
            x1_ref[:, gs:gs + padl] = zpad
            x0_ref[:, gs:gs + padl] = zpad
            x2_ref[:, gs:gs + padl] = zpad

        m0 = m_ref[0:1, :]      # col < W-1   (feeds the dx == 0 taps)
        m2 = m_ref[1:2, :]      # col > 0     (feeds the dx == 2 taps)

        # --- x = c*att + c in f32, edge pre-masking in f32 (native on v5e),
        # bf16 slabs written at 128-aligned offsets feed the MXU.
        for b in range(NB):
            cb = c_ref[b].astype(jnp.float32)
            ab = att_ref[b].astype(jnp.float32)
            xb = cb * ab + cb
            s = padl + b * SLAB
            x1_ref[:, s:s + HW] = xb.astype(jnp.bfloat16)
            x0_ref[:, s:s + HW] = (xb * m0).astype(jnp.bfloat16)
            x2_ref[:, s:s + HW] = (xb * m2).astype(jnp.bfloat16)

        # --- 3x3 conv: nine consecutive accumulating per-tap dots (f32 acc).
        # Each lane-shifted slice is read exactly once, straight into the MXU.
        srcs = (x0_ref, x1_ref, x2_ref)
        acc = None
        for dy in range(3):
            for dx in range(3):
                off = (dy - 1) * W + (dx - 1)
                rhs = srcs[dx][:, padl + off:padl + off + T]
                part = jnp.dot(w_ref[dy * 3 + dx], rhs,
                               preferred_element_type=jnp.float32)
                acc = part if acc is None else acc + part

        # folded-BN bias + ReLU (scale already folded into the weight)
        y = jnp.maximum(acc + b_ref[...], 0.0)                 # (C, T) f32

        # --- squeeze-excite tail, vectorized across the NB slabs:
        # per-slab AdaptiveAvgPool2d(1) -> Conv1d(1,1,k) over channels as k
        # shifted FMAs against a zero-bordered pooled matrix -> sigmoid.
        if pad1 > 0:
            pp_ref[:pad1, :] = jnp.zeros((pad1, NB), jnp.float32)
            pp_ref[pad1 + C:, :] = jnp.zeros((pad1, NB), jnp.float32)
        for b in range(NB):
            s = b * SLAB
            pp_ref[pad1:pad1 + C, b:b + 1] = jnp.mean(
                y[:, s:s + HW], axis=1, keepdims=True)
        wei = jnp.zeros((C, NB), jnp.float32)
        for j in range(k):
            wei = wei + k_ref[j:j + 1, :] * pp_ref[j:j + C, :]
        wei = jax.nn.sigmoid(wei)

        # --- channel re-scaling; lane-dense (H*W) stores per slab
        for b in range(NB):
            s = b * SLAB
            o_ref[b] = (y[:, s:s + HW] * wei[:, b:b + 1]).astype(o_ref.dtype)

    out2 = pl.pallas_call(
        kernel,
        out_shape=jax.ShapeDtypeStruct((N, C, HW), jnp.float32),
        grid_spec=pltpu.PrefetchScalarGridSpec(
            num_scalar_prefetch=0,
            grid=(N // NB,),
            in_specs=[
                pl.BlockSpec((NB, C, HW), lambda n: (n, 0, 0)),   # c (bf16)
                pl.BlockSpec((NB, C, HW), lambda n: (n, 0, 0)),   # att (bf16)
                pl.BlockSpec((9, C, C), lambda n: (0, 0, 0)),     # conv w * bn scale
                pl.BlockSpec((C, 1), lambda n: (0, 0)),           # bn bias
                pl.BlockSpec((2, HW), lambda n: (0, 0)),          # column pre-masks
                pl.BlockSpec((k, 1), lambda n: (0, 0)),           # conv1d taps
            ],
            out_specs=pl.BlockSpec((NB, C, HW), lambda n: (n, 0, 0)),
            scratch_shapes=[
                pltpu.VMEM((C, xz_w), jnp.bfloat16),          # x, zero-padded
                pltpu.VMEM((C, xz_w), jnp.bfloat16),          # x pre-masked (dx=0)
                pltpu.VMEM((C, xz_w), jnp.bfloat16),          # x pre-masked (dx=2)
                pltpu.VMEM((C + 2 * pad1, NB), jnp.float32),  # padded pooled vec
            ],
        ),
        # batch-chunk steps are independent -> shard across TensorCores
        # (2x on v7x, harmless on v5e/v6e); explicit VMEM budget.
        compiler_params=pltpu.CompilerParams(
            dimension_semantics=("parallel",),
            vmem_limit_bytes=32 * 1024 * 1024),
    )(c2, a2, w9, bias, masks, w1k)

    # TODO(synk): for large feature maps (e.g. C=256, H=W=128) add a spatial
    # row-strip grid axis (strip + 1-row halo, "parallel") and a two-pass
    # pool/sigmoid reduction so per-step VMEM fits v7x's 64 MiB per core.

    return out2.reshape(N, C, H, W)


def efm_ref(c, att, w_oihw, gamma, beta, rmean, rvar, w1d, eps=1e-5):
    """Pure-JAX reference (NCHW), mirrors the PyTorch module in eval mode."""
    N, C, H, W = c.shape
    if att.shape != c.shape:
        att = jax.image.resize(att, (att.shape[0], att.shape[1], H, W),
                               method="bilinear")
    x = c * att + c
    y = jax.lax.conv_general_dilated(
        x, w_oihw, window_strides=(1, 1), padding=((1, 1), (1, 1)),
        dimension_numbers=("NCHW", "OIHW", "NCHW"))
    inv_std = 1.0 / jnp.sqrt(rvar + eps)
    y = y * (gamma * inv_std)[None, :, None, None] + \
        (beta - rmean * gamma * inv_std)[None, :, None, None]
    y = jnp.maximum(y, 0.0)
    pooled = jnp.mean(y, axis=(2, 3))                      # (N, C)
    k = w1d.shape[0]
    pad = (k - 1) // 2
    pp = jnp.pad(pooled, ((0, 0), (pad, pad)))
    wei = sum(w1d[j] * pp[:, j:j + C] for j in range(k))   # Conv1d over channels
    wei = jax.nn.sigmoid(wei)
    return y * wei[:, :, None, None]


if __name__ == "__main__":
    # small shapes consistent with the module (N=4 exercises the
    # multi-slab-per-step path with a 2-step grid)
    N, C, H, W = 4, 16, 16, 16

    # k as computed in EFM.__init__
    t = int(abs((math.log(C, 2) + 1) / 2))
    k = t if t % 2 else t + 1     # C=16 -> k=3

    key = jax.random.PRNGKey(0)
    k1, k2, k3, k4, k5, k6, k7, k8 = jax.random.split(key, 8)
    c = jax.random.normal(k1, (N, C, H, W), jnp.float32)
    att = jax.random.normal(k2, (N, C, H, W), jnp.float32)
    # Conv2d(C, C, 3, padding=1, bias=False) weight
    w_oihw = jax.random.normal(k3, (C, C, 3, 3), jnp.float32) * 0.1
    # BatchNorm2d(C) parameters / running stats (eval mode)
    gamma = jax.random.uniform(k4, (C,), jnp.float32, 0.5, 1.5)
    beta = jax.random.normal(k5, (C,), jnp.float32) * 0.1
    rmean = jax.random.normal(k6, (C,), jnp.float32) * 0.1
    rvar = jax.random.uniform(k7, (C,), jnp.float32, 0.5, 1.5)
    # Conv1d(1, 1, k, bias=False) weight, flattened to (k,)
    w1d = jax.random.normal(k8, (k,), jnp.float32) * 0.5

    out = efm_forward(c, att, w_oihw, gamma, beta, rmean, rvar, w1d)
    out = jax.block_until_ready(out)

    ref = efm_ref(c, att, w_oihw, gamma, beta, rmean, rvar, w1d)
    assert out.shape == (N, C, H, W)
    max_err = float(jnp.max(jnp.abs(out - ref)))
    mean_err = float(jnp.mean(jnp.abs(out - ref)))
    # bf16 inputs + bf16 MXU operands (f32 accumulation) vs. f32 reference
    ok = (mean_err < 1e-2) and bool(jnp.allclose(out, ref, atol=5e-2, rtol=5e-2))
    assert ok, "max abs err = %g, mean abs err = %g" % (max_err, mean_err)

    print("KERNEL_OK")
</pallas_src>

<mosaic_0001>
module attributes {stable_mosaic.version = 11 : i64} {
  func.func @kernel(%arg0: i32, %arg1: memref<2x16x256xbf16, #tpu.memory_space<vmem>>, %arg2: memref<2x16x256xbf16, #tpu.memory_space<vmem>>, %arg3: memref<9x16x16xbf16, #tpu.memory_space<vmem>>, %arg4: memref<16x1xf32, #tpu.memory_space<vmem>>, %arg5: memref<2x256xf32, #tpu.memory_space<vmem>>, %arg6: memref<3x1xf32, #tpu.memory_space<vmem>>, %arg7: memref<2x16x256xf32, #tpu.memory_space<vmem>>, %arg8: memref<16x896xbf16, #tpu.memory_space<vmem>>, %arg9: memref<16x896xbf16, #tpu.memory_space<vmem>>, %arg10: memref<16x896xbf16, #tpu.memory_space<vmem>>, %arg11: memref<18x2xf32, #tpu.memory_space<vmem>>) attributes {dimension_semantics = [#tpu.dimension_semantics<parallel>], iteration_bounds = array<i64: 2>, scalar_prefetch = 0 : i64, scratch_operands = 4 : i64, tpu.core_type = #tpu.core_type<tc>, window_params = [{transform_indices = @transform_0, window_bounds = array<i64: 2, 16, 256>}, {transform_indices = @transform_1, window_bounds = array<i64: 2, 16, 256>}, {pipeline_mode = #tpu.pipeline_mode<synchronous>, transform_indices = @transform_2, window_bounds = array<i64: 9, 16, 16>}, {pipeline_mode = #tpu.pipeline_mode<synchronous>, transform_indices = @transform_3, window_bounds = array<i64: 16, 1>}, {pipeline_mode = #tpu.pipeline_mode<synchronous>, transform_indices = @transform_4, window_bounds = array<i64: 2, 256>}, {pipeline_mode = #tpu.pipeline_mode<synchronous>, transform_indices = @transform_5, window_bounds = array<i64: 3, 1>}, {transform_indices = @transform_6, window_bounds = array<i64: 2, 16, 256>}]} {
    %cst = arith.constant 0.000000e+00 : bf16
    %0 = vector.broadcast %cst : bf16 to vector<16x128xbf16>
    %c0 = arith.constant 0 : index
    %c0_0 = arith.constant 0 : index
    %1 = vector.load %arg8[%c0, %c0_0] : memref<16x896xbf16, #tpu.memory_space<vmem>>, vector<16x128xbf16>
    tpu.vector_store %arg8[%c0, %c0_0], %0 {strides = array<i32>} : memref<16x896xbf16, #tpu.memory_space<vmem>>, vector<16x128xbf16>,
    %c0_1 = arith.constant 0 : index
    %c0_2 = arith.constant 0 : index
    %2 = vector.load %arg9[%c0_1, %c0_2] : memref<16x896xbf16, #tpu.memory_space<vmem>>, vector<16x128xbf16>
    tpu.vector_store %arg9[%c0_1, %c0_2], %0 {strides = array<i32>} : memref<16x896xbf16, #tpu.memory_space<vmem>>, vector<16x128xbf16>,
    %c0_3 = arith.constant 0 : index
    %c0_4 = arith.constant 0 : index
    %3 = vector.load %arg10[%c0_3, %c0_4] : memref<16x896xbf16, #tpu.memory_space<vmem>>, vector<16x128xbf16>
    tpu.vector_store %arg10[%c0_3, %c0_4], %0 {strides = array<i32>} : memref<16x896xbf16, #tpu.memory_space<vmem>>, vector<16x128xbf16>,
    %c0_5 = arith.constant 0 : index
    %c384 = arith.constant 384 : index
    %4 = vector.load %arg8[%c0_5, %c384] : memref<16x896xbf16, #tpu.memory_space<vmem>>, vector<16x128xbf16>
    tpu.vector_store %arg8[%c0_5, %c384], %0 {strides = array<i32>} : memref<16x896xbf16, #tpu.memory_space<vmem>>, vector<16x128xbf16>,
    %c0_6 = arith.constant 0 : index
    %c384_7 = arith.constant 384 : index
    %5 = vector.load %arg9[%c0_6, %c384_7] : memref<16x896xbf16, #tpu.memory_space<vmem>>, vector<16x128xbf16>
    tpu.vector_store %arg9[%c0_6, %c384_7], %0 {strides = array<i32>} : memref<16x896xbf16, #tpu.memory_space<vmem>>, vector<16x128xbf16>,
    %c0_8 = arith.constant 0 : index
    %c384_9 = arith.constant 384 : index
    %6 = vector.load %arg10[%c0_8, %c384_9] : memref<16x896xbf16, #tpu.memory_space<vmem>>, vector<16x128xbf16>
    tpu.vector_store %arg10[%c0_8, %c384_9], %0 {strides = array<i32>} : memref<16x896xbf16, #tpu.memory_space<vmem>>, vector<16x128xbf16>,
    %c0_10 = arith.constant 0 : index
    %c768 = arith.constant 768 : index
    %7 = vector.load %arg8[%c0_10, %c768] : memref<16x896xbf16, #tpu.memory_space<vmem>>, vector<16x128xbf16>
    tpu.vector_store %arg8[%c0_10, %c768], %0 {strides = array<i32>} : memref<16x896xbf16, #tpu.memory_space<vmem>>, vector<16x128xbf16>,
    %c0_11 = arith.constant 0 : index
    %c768_12 = arith.constant 768 : index
    %8 = vector.load %arg9[%c0_11, %c768_12] : memref<16x896xbf16, #tpu.memory_space<vmem>>, vector<16x128xbf16>
    tpu.vector_store %arg9[%c0_11, %c768_12], %0 {strides = array<i32>} : memref<16x896xbf16, #tpu.memory_space<vmem>>, vector<16x128xbf16>,
    %c0_13 = arith.constant 0 : index
    %c768_14 = arith.constant 768 : index
    %9 = vector.load %arg10[%c0_13, %c768_14] : memref<16x896xbf16, #tpu.memory_space<vmem>>, vector<16x128xbf16>
    tpu.vector_store %arg10[%c0_13, %c768_14], %0 {strides = array<i32>} : memref<16x896xbf16, #tpu.memory_space<vmem>>, vector<16x128xbf16>,
    %c0_15 = arith.constant 0 : index
    %c0_16 = arith.constant 0 : index
    %10 = vector.load %arg5[%c0_15, %c0_16] : memref<2x256xf32, #tpu.memory_space<vmem>>, vector<1x256xf32>
    %c1 = arith.constant 1 : index
    %c0_17 = arith.constant 0 : index
    %11 = vector.load %arg5[%c1, %c0_17] : memref<2x256xf32, #tpu.memory_space<vmem>>, vector<1x256xf32>
    %c0_18 = arith.constant 0 : index
    %c0_19 = arith.constant 0 : index
    %c0_20 = arith.constant 0 : index
    %12 = vector.load %arg1[%c0_18, %c0_19, %c0_20] : memref<2x16x256xbf16, #tpu.memory_space<vmem>>, vector<1x16x256xbf16>
    %13 = vector.shape_cast %12 : vector<1x16x256xbf16> to vector<16x256xbf16>
    %14 = arith.extf %13 : vector<16x256xbf16> to vector<16x256xf32>
    %c0_21 = arith.constant 0 : index
    %c0_22 = arith.constant 0 : index
    %c0_23 = arith.constant 0 : index
    %15 = vector.load %arg2[%c0_21, %c0_22, %c0_23] : memref<2x16x256xbf16, #tpu.memory_space<vmem>>, vector<1x16x256xbf16>
    %16 = vector.shape_cast %15 : vector<1x16x256xbf16> to vector<16x256xbf16>
    %17 = arith.extf %16 : vector<16x256xbf16> to vector<16x256xf32>
    %18 = arith.mulf %14, %17 : vector<16x256xf32>
    %19 = arith.addf %18, %14 : vector<16x256xf32>
    %20 = arith.truncf %19 : vector<16x256xf32> to vector<16x256xbf16>
    %c0_24 = arith.constant 0 : index
    %c128 = arith.constant 128 : index
    %21 = vector.load %arg8[%c0_24, %c128] : memref<16x896xbf16, #tpu.memory_space<vmem>>, vector<16x256xbf16>
    tpu.vector_store %arg8[%c0_24, %c128], %20 {strides = array<i32>} : memref<16x896xbf16, #tpu.memory_space<vmem>>, vector<16x256xbf16>,
    %22 = vector.broadcast %10 : vector<1x256xf32> to vector<16x256xf32>
    %23 = arith.mulf %19, %22 : vector<16x256xf32>
    %24 = arith.truncf %23 : vector<16x256xf32> to vector<16x256xbf16>
    %c0_25 = arith.constant 0 : index
    %c128_26 = arith.constant 128 : index
    %25 = vector.load %arg9[%c0_25, %c128_26] : memref<16x896xbf16, #tpu.memory_space<vmem>>, vector<16x256xbf16>
    tpu.vector_store %arg9[%c0_25, %c128_26], %24 {strides = array<i32>} : memref<16x896xbf16, #tpu.memory_space<vmem>>, vector<16x256xbf16>,
    %26 = vector.broadcast %11 : vector<1x256xf32> to vector<16x256xf32>
    %27 = arith.mulf %19, %26 : vector<16x256xf32>
    %28 = arith.truncf %27 : vector<16x256xf32> to vector<16x256xbf16>
    %c0_27 = arith.constant 0 : index
    %c128_28 = arith.constant 128 : index
    %29 = vector.load %arg10[%c0_27, %c128_28] : memref<16x896xbf16, #tpu.memory_space<vmem>>, vector<16x256xbf16>
    tpu.vector_store %arg10[%c0_27, %c128_28], %28 {strides = array<i32>} : memref<16x896xbf16, #tpu.memory_space<vmem>>, vector<16x256xbf16>,
    %c1_29 = arith.constant 1 : index
    %c0_30 = arith.constant 0 : index
    %c0_31 = arith.constant 0 : index
    %30 = vector.load %arg1[%c1_29, %c0_30, %c0_31] : memref<2x16x256xbf16, #tpu.memory_space<vmem>>, vector<1x16x256xbf16>
    %31 = vector.shape_cast %30 : vector<1x16x256xbf16> to vector<16x256xbf16>
    %32 = arith.extf %31 : vector<16x256xbf16> to vector<16x256xf32>
    %c1_32 = arith.constant 1 : index
    %c0_33 = arith.constant 0 : index
    %c0_34 = arith.constant 0 : index
    %33 = vector.load %arg2[%c1_32, %c0_33, %c0_34] : memref<2x16x256xbf16, #tpu.memory_space<vmem>>, vector<1x16x256xbf16>
    %34 = vector.shape_cast %33 : vector<1x16x256xbf16> to vector<16x256xbf16>
    %35 = arith.extf %34 : vector<16x256xbf16> to vector<16x256xf32>
    %36 = arith.mulf %32, %35 : vector<16x256xf32>
    %37 = arith.addf %36, %32 : vector<16x256xf32>
    %38 = arith.truncf %37 : vector<16x256xf32> to vector<16x256xbf16>
    %c0_35 = arith.constant 0 : index
    %c512 = arith.constant 512 : index
    %39 = vector.load %arg8[%c0_35, %c512] : memref<16x896xbf16, #tpu.memory_space<vmem>>, vector<16x256xbf16>
    tpu.vector_store %arg8[%c0_35, %c512], %38 {strides = array<i32>} : memref<16x896xbf16, #tpu.memory_space<vmem>>, vector<16x256xbf16>,
    %40 = vector.broadcast %10 : vector<1x256xf32> to vector<16x256xf32>
    %41 = arith.mulf %37, %40 : vector<16x256xf32>
    %42 = arith.truncf %41 : vector<16x256xf32> to vector<16x256xbf16>
    %c0_36 = arith.constant 0 : index
    %c512_37 = arith.constant 512 : index
    %43 = vector.load %arg9[%c0_36, %c512_37] : memref<16x896xbf16, #tpu.memory_space<vmem>>, vector<16x256xbf16>
    tpu.vector_store %arg9[%c0_36, %c512_37], %42 {strides = array<i32>} : memref<16x896xbf16, #tpu.memory_space<vmem>>, vector<16x256xbf16>,
    %44 = vector.broadcast %11 : vector<1x256xf32> to vector<16x256xf32>
    %45 = arith.mulf %37, %44 : vector<16x256xf32>
    %46 = arith.truncf %45 : vector<16x256xf32> to vector<16x256xbf16>
    %c0_38 = arith.constant 0 : index
    %c512_39 = arith.constant 512 : index
    %47 = vector.load %arg10[%c0_38, %c512_39] : memref<16x896xbf16, #tpu.memory_space<vmem>>, vector<16x256xbf16>
    tpu.vector_store %arg10[%c0_38, %c512_39], %46 {strides = array<i32>} : memref<16x896xbf16, #tpu.memory_space<vmem>>, vector<16x256xbf16>,
    %c0_40 = arith.constant 0 : index
    %c111 = arith.constant 111 : index
    %48 = vector.load %arg9[%c0_40, %c111] : memref<16x896xbf16, #tpu.memory_space<vmem>>, vector<16x640xbf16>
    %c0_41 = arith.constant 0 : index
    %c0_42 = arith.constant 0 : index
    %c0_43 = arith.constant 0 : index
    %49 = vector.load %arg3[%c0_41, %c0_42, %c0_43] : memref<9x16x16xbf16, #tpu.memory_space<vmem>>, vector<1x16x16xbf16>
    %50 = vector.shape_cast %49 : vector<1x16x16xbf16> to vector<16x16xbf16>
    %cst_44 = arith.constant dense<0.000000e+00> : vector<16x640xf32>
    %51 = tpu.matmul %50, %48, %cst_44 {dimension_numbers = #tpu.dot_dimension_numbers<[1], [0], [0], [1], [0, 0, 1, 1], [], []>} : vector<16x16xbf16>, vector<16x640xbf16>, vector<16x640xf32> -> vector<16x640xf32>
    %c0_45 = arith.constant 0 : index
    %c112 = arith.constant 112 : index
    %52 = vector.load %arg8[%c0_45, %c112] : memref<16x896xbf16, #tpu.memory_space<vmem>>, vector<16x640xbf16>
    %c1_46 = arith.constant 1 : index
    %c0_47 = arith.constant 0 : index
    %c0_48 = arith.constant 0 : index
    %53 = vector.load %arg3[%c1_46, %c0_47, %c0_48] : memref<9x16x16xbf16, #tpu.memory_space<vmem>>, vector<1x16x16xbf16>
    %54 = vector.shape_cast %53 : vector<1x16x16xbf16> to vector<16x16xbf16>
    %cst_49 = arith.constant dense<0.000000e+00> : vector<16x640xf32>
    %55 = tpu.matmul %54, %52, %cst_49 {dimension_numbers = #tpu.dot_dimension_numbers<[1], [0], [0], [1], [0, 0, 1, 1], [], []>} : vector<16x16xbf16>, vector<16x640xbf16>, vector<16x640xf32> -> vector<16x640xf32>
    %56 = arith.addf %51, %55 : vector<16x640xf32>
    %c0_50 = arith.constant 0 : index
    %c113 = arith.constant 113 : index
    %57 = vector.load %arg10[%c0_50, %c113] : memref<16x896xbf16, #tpu.memory_space<vmem>>, vector<16x640xbf16>
    %c2 = arith.constant 2 : index
    %c0_51 = arith.constant 0 : index
    %c0_52 = arith.constant 0 : index
    %58 = vector.load %arg3[%c2, %c0_51, %c0_52] : memref<9x16x16xbf16, #tpu.memory_space<vmem>>, vector<1x16x16xbf16>
    %59 = vector.shape_cast %58 : vector<1x16x16xbf16> to vector<16x16xbf16>
    %cst_53 = arith.constant dense<0.000000e+00> : vector<16x640xf32>
    %60 = tpu.matmul %59, %57, %cst_53 {dimension_numbers = #tpu.dot_dimension_numbers<[1], [0], [0], [1], [0, 0, 1, 1], [], []>} : vector<16x16xbf16>, vector<16x640xbf16>, vector<16x640xf32> -> vector<16x640xf32>
    %61 = arith.addf %56, %60 : vector<16x640xf32>
    %c0_54 = arith.constant 0 : index
    %c127 = arith.constant 127 : index
    %62 = vector.load %arg9[%c0_54, %c127] : memref<16x896xbf16, #tpu.memory_space<vmem>>, vector<16x640xbf16>
    %c3 = arith.constant 3 : index
    %c0_55 = arith.constant 0 : index
    %c0_56 = arith.constant 0 : index
    %63 = vector.load %arg3[%c3, %c0_55, %c0_56] : memref<9x16x16xbf16, #tpu.memory_space<vmem>>, vector<1x16x16xbf16>
    %64 = vector.shape_cast %63 : vector<1x16x16xbf16> to vector<16x16xbf16>
    %cst_57 = arith.constant dense<0.000000e+00> : vector<16x640xf32>
    %65 = tpu.matmul %64, %62, %cst_57 {dimension_numbers = #tpu.dot_dimension_numbers<[1], [0], [0], [1], [0, 0, 1, 1], [], []>} : vector<16x16xbf16>, vector<16x640xbf16>, vector<16x640xf32> -> vector<16x640xf32>
    %66 = arith.addf %61, %65 : vector<16x640xf32>
    %c0_58 = arith.constant 0 : index
    %c128_59 = arith.constant 128 : index
    %67 = vector.load %arg8[%c0_58, %c128_59] : memref<16x896xbf16, #tpu.memory_space<vmem>>, vector<16x640xbf16>
    %c4 = arith.constant 4 : index
    %c0_60 = arith.constant 0 : index
    %c0_61 = arith.constant 0 : index
    %68 = vector.load %arg3[%c4, %c0_60, %c0_61] : memref<9x16x16xbf16, #tpu.memory_space<vmem>>, vector<1x16x16xbf16>
    %69 = vector.shape_cast %68 : vector<1x16x16xbf16> to vector<16x16xbf16>
    %cst_62 = arith.constant dense<0.000000e+00> : vector<16x640xf32>
    %70 = tpu.matmul %69, %67, %cst_62 {dimension_numbers = #tpu.dot_dimension_numbers<[1], [0], [0], [1], [0, 0, 1, 1], [], []>} : vector<16x16xbf16>, vector<16x640xbf16>, vector<16x640xf32> -> vector<16x640xf32>
    %71 = arith.addf %66, %70 : vector<16x640xf32>
    %c0_63 = arith.constant 0 : index
    %c129 = arith.constant 129 : index
    %72 = vector.load %arg10[%c0_63, %c129] : memref<16x896xbf16, #tpu.memory_space<vmem>>, vector<16x640xbf16>
    %c5 = arith.constant 5 : index
    %c0_64 = arith.constant 0 : index
    %c0_65 = arith.constant 0 : index
    %73 = vector.load %arg3[%c5, %c0_64, %c0_65] : memref<9x16x16xbf16, #tpu.memory_space<vmem>>, vector<1x16x16xbf16>
    %74 = vector.shape_cast %73 : vector<1x16x16xbf16> to vector<16x16xbf16>
    %cst_66 = arith.constant dense<0.000000e+00> : vector<16x640xf32>
    %75 = tpu.matmul %74, %72, %cst_66 {dimension_numbers = #tpu.dot_dimension_numbers<[1], [0], [0], [1], [0, 0, 1, 1], [], []>} : vector<16x16xbf16>, vector<16x640xbf16>, vector<16x640xf32> -> vector<16x640xf32>
    %76 = arith.addf %71, %75 : vector<16x640xf32>
    %c0_67 = arith.constant 0 : index
    %c143 = arith.constant 143 : index
    %77 = vector.load %arg9[%c0_67, %c143] : memref<16x896xbf16, #tpu.memory_space<vmem>>, vector<16x640xbf16>
    %c6 = arith.constant 6 : index
    %c0_68 = arith.constant 0 : index
    %c0_69 = arith.constant 0 : index
    %78 = vector.load %arg3[%c6, %c0_68, %c0_69] : memref<9x16x16xbf16, #tpu.memory_space<vmem>>, vector<1x16x16xbf16>
    %79 = vector.shape_cast %78 : vector<1x16x16xbf16> to vector<16x16xbf16>
    %cst_70 = arith.constant dense<0.000000e+00> : vector<16x640xf32>
    %80 = tpu.matmul %79, %77, %cst_70 {dimension_numbers = #tpu.dot_dimension_numbers<[1], [0], [0], [1], [0, 0, 1, 1], [], []>} : vector<16x16xbf16>, vector<16x640xbf16>, vector<16x640xf32> -> vector<16x640xf32>
    %81 = arith.addf %76, %80 : vector<16x640xf32>
    %c0_71 = arith.constant 0 : index
    %c144 = arith.constant 144 : index
    %82 = vector.load %arg8[%c0_71, %c144] : memref<16x896xbf16, #tpu.memory_space<vmem>>, vector<16x640xbf16>
    %c7 = arith.constant 7 : index
    %c0_72 = arith.constant 0 : index
    %c0_73 = arith.constant 0 : index
    %83 = vector.load %arg3[%c7, %c0_72, %c0_73] : memref<9x16x16xbf16, #tpu.memory_space<vmem>>, vector<1x16x16xbf16>
    %84 = vector.shape_cast %83 : vector<1x16x16xbf16> to vector<16x16xbf16>
    %cst_74 = arith.constant dense<0.000000e+00> : vector<16x640xf32>
    %85 = tpu.matmul %84, %82, %cst_74 {dimension_numbers = #tpu.dot_dimension_numbers<[1], [0], [0], [1], [0, 0, 1, 1], [], []>} : vector<16x16xbf16>, vector<16x640xbf16>, vector<16x640xf32> -> vector<16x640xf32>
    %86 = arith.addf %81, %85 : vector<16x640xf32>
    %c0_75 = arith.constant 0 : index
    %c145 = arith.constant 145 : index
    %87 = vector.load %arg10[%c0_75, %c145] : memref<16x896xbf16, #tpu.memory_space<vmem>>, vector<16x640xbf16>
    %c8 = arith.constant 8 : index
    %c0_76 = arith.constant 0 : index
    %c0_77 = arith.constant 0 : index
    %88 = vector.load %arg3[%c8, %c0_76, %c0_77] : memref<9x16x16xbf16, #tpu.memory_space<vmem>>, vector<1x16x16xbf16>
    %89 = vector.shape_cast %88 : vector<1x16x16xbf16> to vector<16x16xbf16>
    %cst_78 = arith.constant dense<0.000000e+00> : vector<16x640xf32>
    %90 = tpu.matmul %89, %87, %cst_78 {dimension_numbers = #tpu.dot_dimension_numbers<[1], [0], [0], [1], [0, 0, 1, 1], [], []>} : vector<16x16xbf16>, vector<16x640xbf16>, vector<16x640xf32> -> vector<16x640xf32>
    %91 = arith.addf %86, %90 : vector<16x640xf32>
    %c0_79 = arith.constant 0 : index
    %c0_80 = arith.constant 0 : index
    %92 = vector.load %arg4[%c0_79, %c0_80] : memref<16x1xf32, #tpu.memory_space<vmem>>, vector<16x1xf32>
    %93 = vector.broadcast %92 : vector<16x1xf32> to vector<16x640xf32>
    %94 = arith.addf %91, %93 : vector<16x640xf32>
    %cst_81 = arith.constant 0.000000e+00 : f32
    %95 = vector.broadcast %cst_81 : f32 to vector<16x640xf32>
    %96 = arith.maximumf %94, %95 : vector<16x640xf32>
    %cst_82 = arith.constant 0.000000e+00 : f32
    %97 = vector.broadcast %cst_82 : f32 to vector<1x2xf32>
    %c0_83 = arith.constant 0 : index
    %c0_84 = arith.constant 0 : index
    %98 = vector.load %arg11[%c0_83, %c0_84] : memref<18x2xf32, #tpu.memory_space<vmem>>, vector<1x2xf32>
    tpu.vector_store %arg11[%c0_83, %c0_84], %97 {strides = array<i32>} : memref<18x2xf32, #tpu.memory_space<vmem>>, vector<1x2xf32>,
    %cst_85 = arith.constant 0.000000e+00 : f32
    %99 = vector.broadcast %cst_85 : f32 to vector<1x2xf32>
    %c17 = arith.constant 17 : index
    %c0_86 = arith.constant 0 : index
    %100 = vector.load %arg11[%c17, %c0_86] : memref<18x2xf32, #tpu.memory_space<vmem>>, vector<1x2xf32>
    tpu.vector_store %arg11[%c17, %c0_86], %99 {strides = array<i32>} : memref<18x2xf32, #tpu.memory_space<vmem>>, vector<1x2xf32>,
    %101 = vector.extract_strided_slice %96 {offsets = [0, 0], sizes = [16, 256], strides = [1, 1]} : vector<16x640xf32> to vector<16x256xf32>
    %cst_87 = arith.constant dense<0.000000e+00> : vector<16xf32>
    %102 = vector.multi_reduction <add>, %101, %cst_87 [1] : vector<16x256xf32> to vector<16xf32>
    %103 = vector.shape_cast %102 : vector<16xf32> to vector<16x1xf32>
    %cst_88 = arith.constant 2.560000e+02 : f32
    %104 = vector.broadcast %cst_88 : f32 to vector<16x1xf32>
    %105 = arith.divf %103, %104 : vector<16x1xf32>
    %c1_89 = arith.constant 1 : index
    %c0_90 = arith.constant 0 : index
    %106 = vector.load %arg11[%c1_89, %c0_90] : memref<18x2xf32, #tpu.memory_space<vmem>>, vector<16x1xf32>
    tpu.vector_store %arg11[%c1_89, %c0_90], %105 {strides = array<i32>} : memref<18x2xf32, #tpu.memory_space<vmem>>, vector<16x1xf32>,
    %107 = vector.extract_strided_slice %96 {offsets = [0, 384], sizes = [16, 256], strides = [1, 1]} : vector<16x640xf32> to vector<16x256xf32>
    %cst_91 = arith.constant dense<0.000000e+00> : vector<16xf32>
    %108 = vector.multi_reduction <add>, %107, %cst_91 [1] : vector<16x256xf32> to vector<16xf32>
    %109 = vector.shape_cast %108 : vector<16xf32> to vector<16x1xf32>
    %cst_92 = arith.constant 2.560000e+02 : f32
    %110 = vector.broadcast %cst_92 : f32 to vector<16x1xf32>
    %111 = arith.divf %109, %110 : vector<16x1xf32>
    %c1_93 = arith.constant 1 : index
    %c1_94 = arith.constant 1 : index
    %112 = vector.load %arg11[%c1_93, %c1_94] : memref<18x2xf32, #tpu.memory_space<vmem>>, vector<16x1xf32>
    tpu.vector_store %arg11[%c1_93, %c1_94], %111 {strides = array<i32>} : memref<18x2xf32, #tpu.memory_space<vmem>>, vector<16x1xf32>,
    %cst_95 = arith.constant 0.000000e+00 : f32
    %113 = vector.broadcast %cst_95 : f32 to vector<16x2xf32>
    %c0_96 = arith.constant 0 : index
    %c0_97 = arith.constant 0 : index
    %114 = vector.load %arg6[%c0_96, %c0_97] : memref<3x1xf32, #tpu.memory_space<vmem>>, vector<1x1xf32>
    %c0_98 = arith.constant 0 : index
    %c0_99 = arith.constant 0 : index
    %115 = vector.load %arg11[%c0_98, %c0_99] : memref<18x2xf32, #tpu.memory_space<vmem>>, vector<16x2xf32>
    %116 = vector.broadcast %114 : vector<1x1xf32> to vector<16x2xf32>
    %117 = arith.mulf %116, %115 : vector<16x2xf32>
    %118 = arith.addf %113, %117 : vector<16x2xf32>
    %c1_100 = arith.constant 1 : index
    %c0_101 = arith.constant 0 : index
    %119 = vector.load %arg6[%c1_100, %c0_101] : memref<3x1xf32, #tpu.memory_space<vmem>>, vector<1x1xf32>
    %c1_102 = arith.constant 1 : index
    %c0_103 = arith.constant 0 : index
    %120 = vector.load %arg11[%c1_102, %c0_103] : memref<18x2xf32, #tpu.memory_space<vmem>>, vector<16x2xf32>
    %121 = vector.broadcast %119 : vector<1x1xf32> to vector<16x2xf32>
    %122 = arith.mulf %121, %120 : vector<16x2xf32>
    %123 = arith.addf %118, %122 : vector<16x2xf32>
    %c2_104 = arith.constant 2 : index
    %c0_105 = arith.constant 0 : index
    %124 = vector.load %arg6[%c2_104, %c0_105] : memref<3x1xf32, #tpu.memory_space<vmem>>, vector<1x1xf32>
    %c2_106 = arith.constant 2 : index
    %c0_107 = arith.constant 0 : index
    %125 = vector.load %arg11[%c2_106, %c0_107] : memref<18x2xf32, #tpu.memory_space<vmem>>, vector<16x2xf32>
    %126 = vector.broadcast %124 : vector<1x1xf32> to vector<16x2xf32>
    %127 = arith.mulf %126, %125 : vector<16x2xf32>
    %128 = arith.addf %123, %127 : vector<16x2xf32>
    %129 = arith.negf %128 : vector<16x2xf32>
    %130 = math.exp %129 : vector<16x2xf32>
    %cst_108 = arith.constant 1.000000e+00 : f32
    %131 = vector.broadcast %cst_108 : f32 to vector<16x2xf32>
    %132 = arith.addf %131, %130 : vector<16x2xf32>
    %133 = arith.divf %131, %132 : vector<16x2xf32>
    %134 = vector.extract_strided_slice %96 {offsets = [0, 0], sizes = [16, 256], strides = [1, 1]} : vector<16x640xf32> to vector<16x256xf32>
    %135 = vector.extract_strided_slice %133 {offsets = [0, 0], sizes = [16, 1], strides = [1, 1]} : vector<16x2xf32> to vector<16x1xf32>
    %136 = vector.broadcast %135 : vector<16x1xf32> to vector<16x256xf32>
    %137 = arith.mulf %134, %136 : vector<16x256xf32>
    %c0_109 = arith.constant 0 : index
    %c0_110 = arith.constant 0 : index
    %c0_111 = arith.constant 0 : index
    %138 = vector.load %arg7[%c0_109, %c0_110, %c0_111] : memref<2x16x256xf32, #tpu.memory_space<vmem>>, vector<1x16x256xf32>
    %139 = vector.shape_cast %138 : vector<1x16x256xf32> to vector<16x256xf32>
    %140 = vector.shape_cast %137 : vector<16x256xf32> to vector<1x16x256xf32>
    tpu.vector_store %arg7[%c0_109, %c0_110, %c0_111], %140 {strides = array<i32>} : memref<2x16x256xf32, #tpu.memory_space<vmem>>, vector<1x16x256xf32>,
    %141 = vector.extract_strided_slice %96 {offsets = [0, 384], sizes = [16, 256], strides = [1, 1]} : vector<16x640xf32> to vector<16x256xf32>
    %142 = vector.extract_strided_slice %133 {offsets = [0, 1], sizes = [16, 1], strides = [1, 1]} : vector<16x2xf32> to vector<16x1xf32>
    %143 = vector.broadcast %142 : vector<16x1xf32> to vector<16x256xf32>
    %144 = arith.mulf %141, %143 : vector<16x256xf32>
    %c1_112 = arith.constant 1 : index
    %c0_113 = arith.constant 0 : index
    %c0_114 = arith.constant 0 : index
    %145 = vector.load %arg7[%c1_112, %c0_113, %c0_114] : memref<2x16x256xf32, #tpu.memory_space<vmem>>, vector<1x16x256xf32>
    %146 = vector.shape_cast %145 : vector<1x16x256xf32> to vector<16x256xf32>
    %147 = vector.shape_cast %144 : vector<16x256xf32> to vector<1x16x256xf32>
    tpu.vector_store %arg7[%c1_112, %c0_113, %c0_114], %147 {strides = array<i32>} : memref<2x16x256xf32, #tpu.memory_space<vmem>>, vector<1x16x256xf32>,
    return
  }
  func.func @transform_0(%arg0: i32) -> (i32, i32, i32) {
    %c0_i32 = arith.constant 0 : i32
    %c0_i32_0 = arith.constant 0 : i32
    %c0_i32_1 = arith.constant 0 : i32
    return %arg0, %c0_i32, %c0_i32_0 : i32, i32, i32
  }
  func.func @transform_1(%arg0: i32) -> (i32, i32, i32) {
    %c0_i32 = arith.constant 0 : i32
    %c0_i32_0 = arith.constant 0 : i32
    %c0_i32_1 = arith.constant 0 : i32
    return %arg0, %c0_i32, %c0_i32_0 : i32, i32, i32
  }
  func.func @transform_2(%arg0: i32) -> (i32, i32, i32) {
    %c0_i32 = arith.constant 0 : i32
    %c0_i32_0 = arith.constant 0 : i32
    %c0_i32_1 = arith.constant 0 : i32
    %c0_i32_2 = arith.constant 0 : i32
    return %c0_i32, %c0_i32_0, %c0_i32_1 : i32, i32, i32
  }
  func.func @transform_3(%arg0: i32) -> (i32, i32) {
    %c0_i32 = arith.constant 0 : i32
    %c0_i32_0 = arith.constant 0 : i32
    %c0_i32_1 = arith.constant 0 : i32
    return %c0_i32, %c0_i32_0 : i32, i32
  }
  func.func @transform_4(%arg0: i32) -> (i32, i32) {
    %c0_i32 = arith.constant 0 : i32
    %c0_i32_0 = arith.constant 0 : i32
    %c0_i32_1 = arith.constant 0 : i32
    return %c0_i32, %c0_i32_0 : i32, i32
  }
  func.func @transform_5(%arg0: i32) -> (i32, i32) {
    %c0_i32 = arith.constant 0 : i32
    %c0_i32_0 = arith.constant 0 : i32
    %c0_i32_1 = arith.constant 0 : i32
    return %c0_i32, %c0_i32_0 : i32, i32
  }
  func.func @transform_6(%arg0: i32) -> (i32, i32, i32) {
    %c0_i32 = arith.constant 0 : i32
    %c0_i32_0 = arith.constant 0 : i32
    %c0_i32_1 = arith.constant 0 : i32
    return %arg0, %c0_i32, %c0_i32_0 : i32, i32, i32
  }
}

</mosaic_0001>

<llo_original>
// kernel: tpu_custom_call.1
$region0: #{tpu_custom_call.1}
  #allocation0 [shape = 'u32[]', space=smem, size = 0x4, offset = 0x4, fixed_abs, tag = 'smem constant byte address 0x4 - core index']
  #allocation1 [shape = 'u32[144,128]{1,0:T(1,128)}', space=vmem, size = 0x12000, scoped, tag = 'internal scratch']
  #allocation2 [shape = 'bf16[16,896]{1,0:T(8,128)(2,1)}', space=vmem, size = 0x7000, scoped, tag = 'scratch operand']
  #allocation3 [shape = 'bf16[16,896]{1,0:T(8,128)(2,1)}', space=vmem, size = 0x7000, scoped, tag = 'scratch operand']
  #allocation4 [shape = 'bf16[16,896]{1,0:T(8,128)(2,1)}', space=vmem, size = 0x7000, scoped, tag = 'scratch operand']
  #allocation5 [shape = 'f32[18,2]{1,0:T(8,128)}', space=vmem, size = 0x3000, scoped, tag = 'scratch operand']
  %s0 = inlined_call_operand.hbm [shape: bf16[4,16,256], index: 0, kind: input, shape index: {}]
  %s1 = inlined_call_operand.hbm [shape: bf16[4,16,256], index: 1, kind: input, shape index: {}]
  %s2 = inlined_call_operand.hbm [shape: bf16[9,16,16], index: 2, kind: input, shape index: {}]
  %s3 = inlined_call_operand.vmem [shape: f32[16,1], index: 3, kind: input, shape index: {}]
  %s4 = inlined_call_operand.vmem [shape: f32[2,256], index: 4, kind: input, shape index: {}]
  %s5 = inlined_call_operand.vmem [shape: f32[3,1], index: 5, kind: input, shape index: {}]
  %s6 = inlined_call_operand.hbm [shape: f32[4,16,256], index: 6, kind: output, shape index: {}]
  %s7 = sld [smem:[#allocation0]]
  $region69: #{tpu_custom_call.1} parent=0
    _
  %s9 = ssub.s32 1, %s7
  %s10 = scalar_select 0, %s9, %s7
  $region1: #{tpu_custom_call.1} parent=0
    #allocation6 [shape = 'u8[32768]{0}', space=vmem, size = 0x8000, scoped, tag = 'input window, operand 0']
    #allocation7 [shape = 's32[2]{0}', space=sflag, size = 0x8, scoped, tag = 'scoped memory for tpu_custom_call.1']
    #allocation8 [shape = 's32[2]{0}', space=sflag, size = 0x8, scoped, tag = 'scoped memory for tpu_custom_call.1']
    #allocation9 [shape = 'u8[32768]{0}', space=vmem, size = 0x8000, scoped, tag = 'input window, operand 1']
    #allocation10 [shape = 's32[2]{0}', space=sflag, size = 0x8, scoped, tag = 'scoped memory for tpu_custom_call.1']
    #allocation11 [shape = 'u8[36864]{0}', space=vmem, size = 0x9000, scoped, tag = 'input window, operand 2, single buffered']
    #allocation12 [shape = 'u8[65536]{0}', space=vmem, size = 0x10000, scoped, tag = 'output window, operand 0']
    %11 = vsyncpa [#allocation7], 0
    %s12 = scalar_lea.sflag [#allocation7], 1
    %13 = vsyncpa %s12, 0
    %14 = vsyncpa [#allocation10], 0
    %s15 = scalar_lea.sflag [#allocation10], 1
    %16 = vsyncpa %s15, 0
    %17 = vsyncpa [#allocation8], 0
    %s18 = scalar_lea.sflag [#allocation8], 1
    %19 = vsyncpa %s18, 0
    loop: start=0, step=1, limit=4
    $region2: #{tpu_custom_call.1} parent=1 // loop_pre_header
      _
    $region3: #{tpu_custom_call.1} parent=1 // loop_header
      %s21 = sphi 0, %s25
      %p22 = scmp.ge.s32.totalorder %s21, 4
      %s31 = sphi 0, %s33
      %s34 = sphi 0, %s31
      %s35 = sphi 0, %s34
      %s51 = sphi 0, %s35
      %s57 = sphi 0, %s59
      %s60 = sphi 0, %s57
      %s61 = sphi 0, %s60
      %s77 = sphi 0, %s61
      %s81 = sphi 0, %s81
      %s83 = sphi 0, %s81
      %s84 = sphi 0, %s83
      %s98 = sphi 0, %s84
      %s102 = sphi 0, %s102
      %s104 = sphi 0, %s102
      %s105 = sphi 0, %s104
      %s119 = sphi 0, %s105
      %s123 = sphi 0, %s123
      %s125 = sphi 0, %s123
      %s126 = sphi 0, %s125
      %s140 = sphi 0, %s126
      %s144 = sphi 0, %s144
      %s146 = sphi 0, %s144
      %s147 = sphi 0, %s146
      %s161 = sphi 0, %s147
      %s167 = sphi 0, %s169
      %s170 = sphi 0, %s167
      %s171 = sphi 0, %s170
      %s187 = sphi 0, %s171
    $region4: #{tpu_custom_call.1} parent=1 // loop_header_branch
      %24 = sbr.rel (%p22) target = $region8
    $region5: #{tpu_custom_call.1} parent=1 // loop_body
      %s26 = ssub.s32 %s21, 1
      %s27 = ssub.s32 %s21, 2
      %s28 = sadd.s32 %s21, 1
      %s29 = ssub.s32 %s21, %s28
      %p30 = scmp.eq.s32.totalorder %s29, 0
      %s32 = sadd.s32 %s31, 1
      %s33 = scalar_select %p30, %s31, %s32
      %p36 = pneg %p30
      %p37 = scmp.eq.s32.totalorder %s21, 1
      %p38 = por %p36, %p37
      %p39 = scmp.ne.s32.totalorder %s31, %s34
      %p40 = scmp.eq.s32.totalorder %s21, 0
      %p41 = por %p39, %p40
      %p42 = scmp.ne.s32.totalorder %s31, %s34
      %p43 = scmp.eq.s32.totalorder %s26, 1
      %p44 = por %p42, %p43
      %p45 = scmp.ne.s32.totalorder %s34, %s35
      %p46 = scmp.eq.s32.totalorder %s26, 0
      %p47 = por %p45, %p46
      %p48 = scmp.ne.s32.totalorder %s34, %s35
      %p49 = scmp.eq.s32.totalorder %s27, 1
      %p50 = por %p48, %p49
      %p52 = scmp.ne.s32.totalorder %s35, %s51
      %p53 = scmp.eq.s32.totalorder %s27, 0
      %p54 = por %p52, %p53
      %s55 = ssub.s32 %s21, %s28
      %p56 = scmp.eq.s32.totalorder %s55, 0
      %s58 = sadd.s32 %s57, 1
      %s59 = scalar_select %p56, %s57, %s58
      %p62 = pneg %p56
      %p63 = scmp.eq.s32.totalorder %s21, 1
      %p64 = por %p62, %p63
      %p65 = scmp.ne.s32.totalorder %s57, %s60
      %p66 = scmp.eq.s32.totalorder %s21, 0
      %p67 = por %p65, %p66
      %p68 = scmp.ne.s32.totalorder %s57, %s60
      %p69 = scmp.eq.s32.totalorder %s26, 1
      %p70 = por %p68, %p69
      %p71 = scmp.ne.s32.totalorder %s60, %s61
      %p72 = scmp.eq.s32.totalorder %s26, 0
      %p73 = por %p71, %p72
      %p74 = scmp.ne.s32.totalorder %s60, %s61
      %p75 = scmp.eq.s32.totalorder %s27, 1
      %p76 = por %p74, %p75
      %p78 = scmp.ne.s32.totalorder %s61, %s77
      %p79 = scmp.eq.s32.totalorder %s27, 0
      %p80 = por %p78, %p79
      %s82 = sadd.s32 %s81, 1
      %p85 = scmp.eq.s32.totalorder %s21, 1
      %p86 = scmp.ne.s32.totalorder %s81, %s83
      %p87 = scmp.eq.s32.totalorder %s21, 0
      %p88 = por %p86, %p87
      %p89 = scmp.ne.s32.totalorder %s81, %s83
      %p90 = scmp.eq.s32.totalorder %s26, 1
      %p91 = por %p89, %p90
      %p92 = scmp.ne.s32.totalorder %s83, %s84
      %p93 = scmp.eq.s32.totalorder %s26, 0
      %p94 = por %p92, %p93
      %p95 = scmp.ne.s32.totalorder %s83, %s84
      %p96 = scmp.eq.s32.totalorder %s27, 1
      %p97 = por %p95, %p96
      %p99 = scmp.ne.s32.totalorder %s84, %s98
      %p100 = scmp.eq.s32.totalorder %s27, 0
      %p101 = por %p99, %p100
      %s103 = sadd.s32 %s102, 1
      %p106 = scmp.eq.s32.totalorder %s21, 1
      %p107 = scmp.ne.s32.totalorder %s102, %s104
      %p108 = scmp.eq.s32.totalorder %s21, 0
      %p109 = por %p107, %p108
      %p110 = scmp.ne.s32.totalorder %s102, %s104
      %p111 = scmp.eq.s32.totalorder %s26, 1
      %p112 = por %p110, %p111
      %p113 = scmp.ne.s32.totalorder %s104, %s105
      %p114 = scmp.eq.s32.totalorder %s26, 0
      %p115 = por %p113, %p114
      %p116 = scmp.ne.s32.totalorder %s104, %s105
      %p117 = scmp.eq.s32.totalorder %s27, 1
      %p118 = por %p116, %p117
      %p120 = scmp.ne.s32.totalorder %s105, %s119
      %p121 = scmp.eq.s32.totalorder %s27, 0
      %p122 = por %p120, %p121
      %s124 = sadd.s32 %s123, 1
      %p127 = scmp.eq.s32.totalorder %s21, 1
      %p128 = scmp.ne.s32.totalorder %s123, %s125
      %p129 = scmp.eq.s32.totalorder %s21, 0
      %p130 = por %p128, %p129
      %p131 = scmp.ne.s32.totalorder %s123, %s125
      %p132 = scmp.eq.s32.totalorder %s26, 1
      %p133 = por %p131, %p132
      %p134 = scmp.ne.s32.totalorder %s125, %s126
      %p135 = scmp.eq.s32.totalorder %s26, 0
      %p136 = por %p134, %p135
      %p137 = scmp.ne.s32.totalorder %s125, %s126
      %p138 = scmp.eq.s32.totalorder %s27, 1
      %p139 = por %p137, %p138
      %p141 = scmp.ne.s32.totalorder %s126, %s140
      %p142 = scmp.eq.s32.totalorder %s27, 0
      %p143 = por %p141, %p142
      %s145 = sadd.s32 %s144, 1
      %p148 = scmp.eq.s32.totalorder %s21, 1
      %p149 = scmp.ne.s32.totalorder %s144, %s146
      %p150 = scmp.eq.s32.totalorder %s21, 0
      %p151 = por %p149, %p150
      %p152 = scmp.ne.s32.totalorder %s144, %s146
      %p153 = scmp.eq.s32.totalorder %s26, 1
      %p154 = por %p152, %p153
      %p155 = scmp.ne.s32.totalorder %s146, %s147
      %p156 = scmp.eq.s32.totalorder %s26, 0
      %p157 = por %p155, %p156
      %p158 = scmp.ne.s32.totalorder %s146, %s147
      %p159 = scmp.eq.s32.totalorder %s27, 1
      %p160 = por %p158, %p159
      %p162 = scmp.ne.s32.totalorder %s147, %s161
      %p163 = scmp.eq.s32.totalorder %s27, 0
      %p164 = por %p162, %p163
      %s165 = ssub.s32 %s21, %s28
      %p166 = scmp.eq.s32.totalorder %s165, 0
      %s168 = sadd.s32 %s167, 1
      %s169 = scalar_select %p166, %s167, %s168
      %p172 = pneg %p166
      %p173 = scmp.eq.s32.totalorder %s21, 1
      %p174 = por %p172, %p173
      %p175 = scmp.ne.s32.totalorder %s167, %s170
      %p176 = scmp.eq.s32.totalorder %s21, 0
      %p177 = por %p175, %p176
      %p178 = scmp.ne.s32.totalorder %s167, %s170
      %p179 = scmp.eq.s32.totalorder %s26, 1
      %p180 = por %p178, %p179
      %p181 = scmp.ne.s32.totalorder %s170, %s171
      %p182 = scmp.eq.s32.totalorder %s26, 0
      %p183 = por %p181, %p182
      %p184 = scmp.ne.s32.totalorder %s170, %s171
      %p185 = scmp.eq.s32.totalorder %s27, 1
      %p186 = por %p184, %p185
      %p188 = scmp.ne.s32.totalorder %s171, %s187
      %p189 = scmp.eq.s32.totalorder %s27, 0
      %p190 = por %p188, %p189
      %p191 = scmp.le.s32.totalorder 1, %s21
      %p192 = scmp.lt.s32.totalorder %s21, 3
      %p193 = pnand %p191, %p192
      %p194 = pneg %p193
      // Predicated region
      $region9: #{tpu_custom_call.1} parent=5 // pred_check
        _
      $region10: #{tpu_custom_call.1} parent=5 // pred_check_branch
        %196 = sbr.rel (%p193) target = $region12
      $region11: #{tpu_custom_call.1} parent=5 // pred_region
        %s197 = ssub.s32 %s21, 1
        // Predicated region
        $region13: #{tpu_custom_call.1} parent=11 // pred_check
          %p198 = pneg %p94
        $region14: #{tpu_custom_call.1} parent=11 // pred_check_branch
          %200 = sbr.rel (%p198) target = $region16
        $region15: #{tpu_custom_call.1} parent=11 // pred_region
          %s202 = ssub.s32 1152, 1152
          %203 = vsyncadd [#allocation10], %s202
          %s204 = sshll.u32 [#allocation11], 4
          %s205 = int_to_ptr.vmem [resolvable:$true] %s204
          %210 = dma.hbm_to_vmem [thread:$0]  %s2, 1152, %s205, [#allocation10], 64, 64, 4
        $region16: #{tpu_custom_call.1} parent=11 // pred_fallthru
          _
        // Predicated region
        $region17: #{tpu_custom_call.1} parent=11 // pred_check
          %p211 = pneg %p115
        $region18: #{tpu_custom_call.1} parent=11 // pred_check_branch
          %213 = sbr.rel (%p211) target = $region20
        $region19: #{tpu_custom_call.1} parent=11 // pred_region
          _
        $region20: #{tpu_custom_call.1} parent=11 // pred_fallthru
          _
        // Predicated region
        $region21: #{tpu_custom_call.1} parent=11 // pred_check
          %p214 = pneg %p136
        $region22: #{tpu_custom_call.1} parent=11 // pred_check_branch
          %216 = sbr.rel (%p214) target = $region24
        $region23: #{tpu_custom_call.1} parent=11 // pred_region
          _
        $region24: #{tpu_custom_call.1} parent=11 // pred_fallthru
          _
        // Predicated region
        $region25: #{tpu_custom_call.1} parent=11 // pred_check
          %p217 = pneg %p157
        $region26: #{tpu_custom_call.1} parent=11 // pred_check_branch
          %219 = sbr.rel (%p217) target = $region28
        $region27: #{tpu_custom_call.1} parent=11 // pred_region
          _
        $region28: #{tpu_custom_call.1} parent=11 // pred_fallthru
          _
      $region12: #{tpu_custom_call.1} parent=5 // pred_fallthru
        _
      %p220 = scmp.lt.s32.totalorder %s21, 2
      // Predicated region
      $region29: #{tpu_custom_call.1} parent=5 // pred_check
        %p221 = pneg %p220
      $region30: #{tpu_custom_call.1} parent=5 // pred_check_branch
        %223 = sbr.rel (%p221) target = $region32
      $region31: #{tpu_custom_call.1} parent=5 // pred_region
        // Predicated region
        $region33: #{tpu_custom_call.1} parent=31 // pred_check
          %p224 = pneg %p41
        $region34: #{tpu_custom_call.1} parent=31 // pred_check_branch
          %226 = sbr.rel (%p224) target = $region36
        $region35: #{tpu_custom_call.1} parent=31 // pred_region
          %s227 = sand.u32 %s31, 1
          %s228 = scalar_lea.sflag [#allocation7], %s227
          %s229 = sand.u32 %s31, 1
          %s230 = smul.addr %s229, 32
          %s231 = scalar_lea.vmem [#allocation6], %s230
          %s232 = smul.u32 2, %s21
          %s234 = ssub.s32 512, 512
          %235 = vsyncadd %s228, %s234
          %s236 = smul.addr %s232, 4
          %s237 = smul.addr %s236, 64
          %s238 = scalar_lea.hbm %s0, %s237
          %s239 = sshll.u32 %s231, 4
          %s240 = int_to_ptr.vmem [resolvable:$true] %s239
          %245 = dma.hbm_to_vmem [thread:$0]  %s238, 512, %s240, %s228, 128, 128, 8
        $region36: #{tpu_custom_call.1} parent=31 // pred_fallthru
          _
        // Predicated region
        $region37: #{tpu_custom_call.1} parent=31 // pred_check
          %p246 = pneg %p67
        $region38: #{tpu_custom_call.1} parent=31 // pred_check_branch
          %248 = sbr.rel (%p246) target = $region40
        $region39: #{tpu_custom_call.1} parent=31 // pred_region
          %s249 = sand.u32 %s21, 1
          %s250 = scalar_lea.sflag [#allocation10], %s249
          %s251 = sand.u32 %s57, 1
          %s252 = smul.addr %s251, 32
          %s253 = scalar_lea.vmem [#allocation9], %s252
          %s254 = smul.u32 2, %s21
          %s256 = ssub.s32 512, 512
          %257 = vsyncadd %s250, %s256
          %s258 = smul.addr %s254, 4
          %s259 = smul.addr %s258, 64
          %s260 = scalar_lea.hbm %s1, %s259
          %s261 = sshll.u32 %s253, 4
          %s262 = int_to_ptr.vmem [resolvable:$true] %s261
          %267 = dma.hbm_to_vmem [thread:$0]  %s260, 512, %s262, %s250, 128, 128, 8
        $region40: #{tpu_custom_call.1} parent=31 // pred_fallthru
          _
      $region32: #{tpu_custom_call.1} parent=5 // pred_fallthru
        _
      %p268 = scmp.le.s32.totalorder 1, %s21
      %p269 = scmp.lt.s32.totalorder %s21, 3
      %p270 = pnand %p268, %p269
      %p271 = pneg %p270
      // Predicated region
      $region41: #{tpu_custom_call.1} parent=5 // pred_check
        _
      $region42: #{tpu_custom_call.1} parent=5 // pred_check_branch
        %273 = sbr.rel (%p270) target = $region44
      $region43: #{tpu_custom_call.1} parent=5 // pred_region
        %s274 = ssub.s32 %s21, 1
        %s275 = sand.u32 %s34, 1
        %s276 = scalar_lea.sflag [#allocation7], %s275
        %s277 = sand.u32 %s34, 1
        %s278 = smul.addr %s277, 32
        %s279 = scalar_lea.vmem [#allocation6], %s278
        // Predicated region
        $region45: #{tpu_custom_call.1} parent=43 // pred_check
          %p280 = pneg %p47
        $region46: #{tpu_custom_call.1} parent=43 // pred_check_branch
          %282 = sbr.rel (%p280) target = $region48
        $region47: #{tpu_custom_call.1} parent=43 // pred_region
          %283 = dma.done %s276, 512
        $region48: #{tpu_custom_call.1} parent=43 // pred_fallthru
          _
        %s284 = sand.u32 %s26, 1
        %s285 = scalar_lea.sflag [#allocation10], %s284
        %s286 = sand.u32 %s60, 1
        %s287 = smul.addr %s286, 32
        %s288 = scalar_lea.vmem [#allocation9], %s287
        // Predicated region
        $region49: #{tpu_custom_call.1} parent=43 // pred_check
          %p289 = pneg %p73
        $region50: #{tpu_custom_call.1} parent=43 // pred_check_branch
          %291 = sbr.rel (%p289) target = $region52
        $region51: #{tpu_custom_call.1} parent=43 // pred_region
          %292 = dma.done %s285, 512
        $region52: #{tpu_custom_call.1} parent=43 // pred_fallthru
          _
        // Predicated region
        $region53: #{tpu_custom_call.1} parent=43 // pred_check
          %p293 = pneg %p94
        $region54: #{tpu_custom_call.1} parent=43 // pred_check_branch
          %295 = sbr.rel (%p293) target = $region56
        $region55: #{tpu_custom_call.1} parent=43 // pred_region
          %296 = dma.done [#allocation10], 1152
        $region56: #{tpu_custom_call.1} parent=43 // pred_fallthru
          _
        %s297 = sand.u32 %s34, 1
        %s298 = scalar_lea.sflag [#allocation7], %s297
        %s299 = sand.u32 %s34, 1
        %s300 = smul.addr %s299, 32
        %s301 = scalar_lea.vmem [#allocation6], %s300
        %p302 = pneg %p47
        %p303 = pneg %p44
        %s304 = sand.u32 %s26, 1
        %s305 = scalar_lea.sflag [#allocation10], %s304
        %s306 = sand.u32 %s60, 1
        %s307 = smul.addr %s306, 32
        %s308 = scalar_lea.vmem [#allocation9], %s307
        %p309 = pneg %p73
        %p310 = pneg %p70
        %p311 = pneg %p94
        %p312 = pneg %p91
        %p313 = pneg %p115
        %p314 = pneg %p112
        %p315 = pneg %p136
        %p316 = pneg %p133
        %p317 = pneg %p157
        %p318 = pneg %p154
        %p319 = pneg %p183
        %p320 = pneg %p180
        %s321 = sand.u32 %s170, 1
        %s322 = scalar_lea.sflag [#allocation8], %s321
        %s323 = sand.u32 %s170, 1
        %s324 = smul.addr %s323, 64
        %s325 = scalar_lea.vmem [#allocation12], %s324
        %s326 = smul.u32 2, %s26
        %s327 = smul.u32 2, %s26
        %s328 = smul.u32 2, %s26
        %330 = vst [vmem:[#allocation2] sm:$0xf] 0
        %331 = vst [vmem:[#allocation2 + $0x1c] sm:$0xf] 0
        %332 = vst [vmem:[#allocation3] sm:$0xf] 0
        %333 = vst [vmem:[#allocation3 + $0x1c] sm:$0xf] 0
        %334 = vst [vmem:[#allocation4] sm:$0xf] 0
        %335 = vst [vmem:[#allocation4 + $0x1c] sm:$0xf] 0
        %336 = vst [vmem:[#allocation2 + $0xc] sm:$0xf] 0
        %337 = vst [vmem:[#allocation2 + $0x28] sm:$0xf] 0
        %338 = vst [vmem:[#allocation3 + $0xc] sm:$0xf] 0
        %339 = vst [vmem:[#allocation3 + $0x28] sm:$0xf] 0
        %340 = vst [vmem:[#allocation4 + $0xc] sm:$0xf] 0
        %341 = vst [vmem:[#allocation4 + $0x28] sm:$0xf] 0
        %342 = vst [vmem:[#allocation2 + $0x18] sm:$0xf] 0
        %343 = vst [vmem:[#allocation2 + $0x34] sm:$0xf] 0
        %344 = vst [vmem:[#allocation3 + $0x18] sm:$0xf] 0
        %345 = vst [vmem:[#allocation3 + $0x34] sm:$0xf] 0
        %346 = vst [vmem:[#allocation4 + $0x18] sm:$0xf] 0
        %347 = vst [vmem:[#allocation4 + $0x34] sm:$0xf] 0
        %v348 = vld [vmem:[%s4] ss:$2 sm:$0x3]
        %s349 = scalar_lea.vmem %s4, 1
        %v350 = vld [vmem:[%s349] ss:$2 sm:$0x3]
        %v351 = vld [vmem:[%s279] sm:$0xff]
        %v352 = vld [vmem:[%s279 + $0x8] sm:$0xff]
        %v353 = vunpack.c.l.bf16 %v351
        %v354 = vunpack.c.h.bf16 %v351
        %v355 = vunpack.c.l.bf16 %v352
        %v356 = vunpack.c.h.bf16 %v352
        %v357 = vld [vmem:[%s288] sm:$0xff]
        %v358 = vld [vmem:[%s288 + $0x8] sm:$0xff]
        %v359 = vunpack.c.l.bf16 %v357
        %v360 = vunpack.c.h.bf16 %v357
        %v361 = vunpack.c.l.bf16 %v358
        %v362 = vunpack.c.h.bf16 %v358
        %v363 = vmul.f32 %v353, %v359
        %v364 = vmul.f32 %v354, %v360
        %v365 = vmul.f32 %v355, %v361
        %v366 = vmul.f32 %v356, %v362
        %v367 = vadd.f32 %v363, %v353
        %v368 = vadd.f32 %v364, %v354
        %v369 = vadd.f32 %v365, %v355
        %v370 = vadd.f32 %v366, %v356
        %v371 = vpack.c.bf16 %v369, %v367
        %v372 = vpack.c.bf16 %v370, %v368
        %v375 = vunpack.c.l.b16 %v371
        %v376 = vunpack.c.l.b16 %v372
        %v377 = vunpack.c.h.b16 %v371
        %v378 = vunpack.c.h.b16 %v372
        %v379 = vpack.c.b16 %v376, %v375
        %v380 = vpack.c.b16 %v378, %v377
        %383 = vst [vmem:[#allocation2 + $0x4] sm:$0xff] %v379
        %384 = vst [vmem:[#allocation2 + $0x20] sm:$0xff] %v380
        %v386 = vlaneseq
        %v387 = vshrl.u32 %v386, 7
        %v388 = vsub.s32 0, %v387
        %v389 = vrot.slane %v348, %v388
        %v390 = vlaneseq
        %v391 = vshrl.u32 %v390, 7
        %v392 = vsub.s32 1, %v391
        %v393 = vrot.slane %v348, %v392
        %v396 = vmul.f32 %v367, %v389
        %v397 = vmul.f32 %v368, %v393
        %v398 = vmul.f32 %v369, %v389
        %v399 = vmul.f32 %v370, %v393
        %v400 = vpack.c.bf16 %v398, %v396
        %v401 = vpack.c.bf16 %v399, %v397
        %v404 = vunpack.c.l.b16 %v400
        %v405 = vunpack.c.l.b16 %v401
        %v406 = vunpack.c.h.b16 %v400
        %v407 = vunpack.c.h.b16 %v401
        %v408 = vpack.c.b16 %v405, %v404
        %v409 = vpack.c.b16 %v407, %v406
        %412 = vst [vmem:[#allocation3 + $0x4] sm:$0xff] %v408
        %413 = vst [vmem:[#allocation3 + $0x20] sm:$0xff] %v409
        %v415 = vlaneseq
        %v416 = vshrl.u32 %v415, 7
        %v417 = vsub.s32 0, %v416
        %v418 = vrot.slane %v350, %v417
        %v419 = vlaneseq
        %v420 = vshrl.u32 %v419, 7
        %v421 = vsub.s32 1, %v420
        %v422 = vrot.slane %v350, %v421
        %v425 = vmul.f32 %v367, %v418
        %v426 = vmul.f32 %v368, %v422
        %v427 = vmul.f32 %v369, %v418
        %v428 = vmul.f32 %v370, %v422
        %v429 = vpack.c.bf16 %v427, %v425
        %v430 = vpack.c.bf16 %v428, %v426
        %v433 = vunpack.c.l.b16 %v429
        %v434 = vunpack.c.l.b16 %v430
        %v435 = vunpack.c.h.b16 %v429
        %v436 = vunpack.c.h.b16 %v430
        %v437 = vpack.c.b16 %v434, %v433
        %v438 = vpack.c.b16 %v436, %v435
        %441 = vst [vmem:[#allocation4 + $0x4] sm:$0xff] %v437
        %442 = vst [vmem:[#allocation4 + $0x20] sm:$0xff] %v438
        %s443 = scalar_lea.vmem %s279, 16 [#allocation6]
        %v444 = vld [vmem:[%s443] sm:$0xff]
        %v445 = vld [vmem:[%s443 + $0x8] sm:$0xff]
        %v446 = vunpack.c.l.bf16 %v444
        %v447 = vunpack.c.h.bf16 %v444
        %v448 = vunpack.c.l.bf16 %v445
        %v449 = vunpack.c.h.bf16 %v445
        %s450 = scalar_lea.vmem %s288, 16 [#allocation9]
        %v451 = vld [vmem:[%s450] sm:$0xff]
        %v452 = vld [vmem:[%s450 + $0x8] sm:$0xff]
        %v453 = vunpack.c.l.bf16 %v451
        %v454 = vunpack.c.h.bf16 %v451
        %v455 = vunpack.c.l.bf16 %v452
        %v456 = vunpack.c.h.bf16 %v452
        %v457 = vmul.f32 %v446, %v453
        %v458 = vmul.f32 %v447, %v454
        %v459 = vmul.f32 %v448, %v455
        %v460 = vmul.f32 %v449, %v456
        %v461 = vadd.f32 %v457, %v446
        %v462 = vadd.f32 %v458, %v447
        %v463 = vadd.f32 %v459, %v448
        %v464 = vadd.f32 %v460, %v449
        %v465 = vpack.c.bf16 %v463, %v461
        %v466 = vpack.c.bf16 %v464, %v462
        %v469 = vunpack.c.l.b16 %v465
        %v470 = vunpack.c.l.b16 %v466
        %v471 = vunpack.c.h.b16 %v465
        %v472 = vunpack.c.h.b16 %v466
        %v473 = vpack.c.b16 %v470, %v469
        %v474 = vpack.c.b16 %v472, %v471
        %477 = vst [vmem:[#allocation2 + $0x10] sm:$0xff] %v473
        %478 = vst [vmem:[#allocation2 + $0x2c] sm:$0xff] %v474
        %v479 = vmul.f32 %v461, %v389
        %v480 = vmul.f32 %v462, %v393
        %v481 = vmul.f32 %v463, %v389
        %v482 = vmul.f32 %v464, %v393
        %v483 = vpack.c.bf16 %v481, %v479
        %v484 = vpack.c.bf16 %v482, %v480
        %v487 = vunpack.c.l.b16 %v483
        %v488 = vunpack.c.l.b16 %v484
        %v489 = vunpack.c.h.b16 %v483
        %v490 = vunpack.c.h.b16 %v484
        %v491 = vpack.c.b16 %v488, %v487
        %v492 = vpack.c.b16 %v490, %v489
        %495 = vst [vmem:[#allocation3 + $0x10] sm:$0xff] %v491
        %496 = vst [vmem:[#allocation3 + $0x2c] sm:$0xff] %v492
        %v497 = vmul.f32 %v461, %v418
        %v498 = vmul.f32 %v462, %v422
        %v499 = vmul.f32 %v463, %v418
        %v500 = vmul.f32 %v464, %v422
        %v501 = vpack.c.bf16 %v499, %v497
        %v502 = vpack.c.bf16 %v500, %v498
        %v505 = vunpack.c.l.b16 %v501
        %v506 = vunpack.c.l.b16 %v502
        %v507 = vunpack.c.h.b16 %v501
        %v508 = vunpack.c.h.b16 %v502
        %v509 = vpack.c.b16 %v506, %v505
        %v510 = vpack.c.b16 %v508, %v507
        %513 = vst [vmem:[#allocation4 + $0x10] sm:$0xff] %v509
        %514 = vst [vmem:[#allocation4 + $0x2c] sm:$0xff] %v510
        %v515 = vld [vmem:[#allocation3] sm:$0xff]
        %v516 = vld [vmem:[#allocation3 + $0x8] sm:$0xff]
        %v517 = vld [vmem:[#allocation3 + $0x10] sm:$0xff]
        %v518 = vld [vmem:[#allocation3 + $0x1c] sm:$0xff]
        %v519 = vld [vmem:[#allocation3 + $0x24] sm:$0xff]
        %v520 = vld [vmem:[#allocation3 + $0x2c] sm:$0xff]
        %v521 = vld [vmem:[#allocation11] sm:$0xf]
        %v522 = vld [vmem:[#allocation11 + $0x4] sm:$0xf]
        %v523 = vld [vmem:[#allocation2] sm:$0xff]
        %v524 = vld [vmem:[#allocation2 + $0x8] sm:$0xff]
        %v525 = vld [vmem:[#allocation2 + $0x10] sm:$0xff]
        %v526 = vld [vmem:[#allocation2 + $0x1c] sm:$0xff]
        %v527 = vld [vmem:[#allocation2 + $0x24] sm:$0xff]
        %v528 = vld [vmem:[#allocation2 + $0x2c] sm:$0xff]
        %s529 = scalar_lea.vmem [#allocation11], 8
        %v530 = vld [vmem:[%s529] sm:$0xf]
        %v531 = vld [vmem:[%s529 + $0x4] sm:$0xf]
        %v534 = vunpack.c.l.b16 %v530
        %v535 = vunpack.c.l.b16 %v531
        %v536 = vpack.c.b16 %v535, %v534
        %v543 = vunpack.c.l.b16 %v523
        %v544 = vunpack.c.h.b16 %v523
        %v545 = vunpack.c.l.b16 %v524
        %v546 = vunpack.c.h.b16 %v524
        %v547 = vunpack.c.l.b16 %v525
        %v548 = vunpack.c.h.b16 %v525
        %v549 = vunpack.c.l.b16 %v526
        %v550 = vunpack.c.h.b16 %v526
        %v551 = vunpack.c.l.b16 %v527
        %v552 = vunpack.c.h.b16 %v527
        %v553 = vunpack.c.l.b16 %v528
        %v554 = vunpack.c.h.b16 %v528
        %v555 = vpack.c.b16 %v549, %v543
        %v556 = vpack.c.b16 %v550, %v544
        %v557 = vpack.c.b16 %v551, %v545
        %v558 = vpack.c.b16 %v552, %v546
        %v559 = vpack.c.b16 %v553, %v547
        %v560 = vpack.c.b16 %v554, %v548
        %561 = vrot.lane.b32.xlu0 %v555, 16
        %v562 = vpop.permute.xlu0 %561
        %563 = vrot.lane.b32.xlu0 %v556, 16
        %v564 = vpop.permute.xlu0 %563
        %565 = vrot.lane.b32.xlu0 %v557, 16
        %v566 = vpop.permute.xlu0 %565
        %567 = vrot.lane.b32.xlu0 %v558, 16
        %v568 = vpop.permute.xlu0 %567
        %569 = vrot.lane.b32.xlu0 %v559, 16
        %v570 = vpop.permute.xlu0 %569
        %571 = vrot.lane.b32.xlu0 %v560, 16
        %v572 = vpop.permute.xlu0 %571
        %vm573 = vcmask 130048
        %v574 = vsel %vm573, %v562, %v564
        %v575 = vsel %vm573, %v564, %v566
        %v576 = vsel %vm573, %v566, %v568
        %v577 = vsel %vm573, %v568, %v570
        %v578 = vsel %vm573, %v570, %v572
        %vm584 = vcmask 130048
        %v586 = vsel %vm584, %v536, 0
        %588 = vmatprep.subr.bf16.mxu0 0
        %589 = vmatpush1.bf16.msra.mxu0 0
        %590 = vmatprep.subr.bf16.mxu0 0
        %591 = vmatpush1.bf16.msra.mxu0 0
        %592 = vmatprep.subr.bf16.mxu0 0
        %593 = vmatpush1.bf16.msra.mxu0 0
        %594 = vmatprep.subr.bf16.mxu0 0
        %595 = vmatpush1.bf16.msra.mxu0 0
        %596 = vmatprep.subr.bf16.mxu0 0
        %597 = vmatpush1.bf16.msra.mxu0 0
        %598 = vmatprep.subr.bf16.mxu0 0
        %599 = vmatpush1.bf16.msra.mxu0 0
        %600 = vmatprep.subr.bf16.mxu0 0
        %601 = vmatpush1.bf16.msra.mxu0 0
        %602 = vmatprep.subr.bf16.mxu0 %v575
        %603 = vmatpush1.bf16.msra.mxu0 %v574
        %604 = vmatprep.subr.bf16.mxu0 0
        %605 = vmatpush2.bf16.msra.mxu0 0
        %606 = vmatprep.subr.bf16.mxu0 0
        %607 = vmatpush2.bf16.msra.mxu0 0
        %608 = vmatprep.subr.bf16.mxu0 0
        %609 = vmatpush2.bf16.msra.mxu0 0
        %610 = vmatprep.subr.bf16.mxu0 0
        %611 = vmatpush2.bf16.msra.mxu0 0
        %612 = vmatprep.subr.bf16.mxu0 0
        %613 = vmatpush2.bf16.msra.mxu0 0
        %614 = vmatprep.subr.bf16.mxu0 0
        %615 = vmatpush2.bf16.msra.mxu0 0
        %616 = vmatprep.subr.bf16.mxu0 0
        %617 = vmatpush2.bf16.msra.mxu0 0
        %618 = vmatprep.subr.bf16.mxu0 0
        %619 = vmatpush2.bf16.msra.mxu0 0
        %620 = vmatprep.mubr.bf16.mxu0 0
        %621 = vmatmul.mubr.bf16.gmra.mxu0 %v586
        %v622 = vpop.f32.mrf.mxu0
        %v623 = vadd.f32 0.0, %v622
        %v624 = vpop.f32.mrf.mxu0
        %v625 = vadd.f32 0.0, %v624
        %v626 = vpop.f32.mrf.mxu0
        %v627 = vadd.f32 0.0, %v626
        %v628 = vpop.f32.mrf.mxu0
        %v629 = vadd.f32 0.0, %v628
        %630 = vdwg.mxu0
        %631 = vmatprep.subr.bf16.mxu0 0
        %632 = vmatpush1.bf16.msra.mxu0 0
        %633 = vmatprep.subr.bf16.mxu0 0
        %634 = vmatpush1.bf16.msra.mxu0 0
        %635 = vmatprep.subr.bf16.mxu0 0
        %636 = vmatpush1.bf16.msra.mxu0 0
        %637 = vmatprep.subr.bf16.mxu0 0
        %638 = vmatpush1.bf16.msra.mxu0 0
        %639 = vmatprep.subr.bf16.mxu0 0
        %640 = vmatpush1.bf16.msra.mxu0 0
        %641 = vmatprep.subr.bf16.mxu0 0
        %642 = vmatpush1.bf16.msra.mxu0 0
        %643 = vmatprep.subr.bf16.mxu0 0
        %644 = vmatpush1.bf16.msra.mxu0 0
        %645 = vmatprep.subr.bf16.mxu0 %v577
        %646 = vmatpush1.bf16.msra.mxu0 %v576
        %647 = vmatprep.subr.bf16.mxu0 0
        %648 = vmatpush2.bf16.msra.mxu0 0
        %649 = vmatprep.subr.bf16.mxu0 0
        %650 = vmatpush2.bf16.msra.mxu0 0
        %651 = vmatprep.subr.bf16.mxu0 0
        %652 = vmatpush2.bf16.msra.mxu0 0
        %653 = vmatprep.subr.bf16.mxu0 0
        %654 = vmatpush2.bf16.msra.mxu0 0
        %655 = vmatprep.subr.bf16.mxu0 0
        %656 = vmatpush2.bf16.msra.mxu0 0
        %657 = vmatprep.subr.bf16.mxu0 0
        %658 = vmatpush2.bf16.msra.mxu0 0
        %659 = vmatprep.subr.bf16.mxu0 0
        %660 = vmatpush2.bf16.msra.mxu0 0
        %661 = vmatprep.subr.bf16.mxu0 0
        %662 = vmatpush2.bf16.msra.mxu0 0
        %663 = vmatprep.mubr.bf16.mxu0 0
        %664 = vmatmul.mubr.bf16.gmra.mxu0 %v586
        %v665 = vpop.f32.mrf.mxu0
        %v666 = vpop.f32.mrf.mxu0
        %v667 = vadd.f32 0.0, %v666
        %v668 = vpop.f32.mrf.mxu0
        %v669 = vpop.f32.mrf.mxu0
        %v670 = vadd.f32 0.0, %v669
        %671 = vdwg.mxu0
        %672 = vmatprep.subr.bf16.mxu0 0
        %673 = vmatpush1.bf16.msra.mxu0 0
        %674 = vmatprep.subr.bf16.mxu0 0
        %675 = vmatpush1.bf16.msra.mxu0 0
        %676 = vmatprep.subr.bf16.mxu0 0
        %677 = vmatpush1.bf16.msra.mxu0 0
        %678 = vmatprep.subr.bf16.mxu0 0
        %679 = vmatpush1.bf16.msra.mxu0 0
        %680 = vmatprep.subr.bf16.mxu0 0
        %681 = vmatpush1.bf16.msra.mxu0 0
        %682 = vmatprep.subr.bf16.mxu0 0
        %683 = vmatpush1.bf16.msra.mxu0 0
        %684 = vmatprep.subr.bf16.mxu0 0
        %685 = vmatpush1.bf16.msra.mxu0 0
        %686 = vmatprep.subr.bf16.mxu0 0
        %687 = vmatpush1.bf16.msra.mxu0 %v578
        %688 = vmatprep.subr.bf16.mxu0 0
        %689 = vmatpush2.bf16.msra.mxu0 0
        %690 = vmatprep.subr.bf16.mxu0 0
        %691 = vmatpush2.bf16.msra.mxu0 0
        %692 = vmatprep.subr.bf16.mxu0 0
        %693 = vmatpush2.bf16.msra.mxu0 0
        %694 = vmatprep.subr.bf16.mxu0 0
        %695 = vmatpush2.bf16.msra.mxu0 0
        %696 = vmatprep.subr.bf16.mxu0 0
        %697 = vmatpush2.bf16.msra.mxu0 0
        %698 = vmatprep.subr.bf16.mxu0 0
        %699 = vmatpush2.bf16.msra.mxu0 0
        %700 = vmatprep.subr.bf16.mxu0 0
        %701 = vmatpush2.bf16.msra.mxu0 0
        %702 = vmatprep.subr.bf16.mxu0 0
        %703 = vmatpush2.bf16.msra.mxu0 0
        %704 = vmatprep.mubr.bf16.mxu0 0
        %705 = vmatmul.mubr.bf16.gmra.mxu0 %v586
        %v706 = vpop.f32.mrf.mxu0
        %v707 = vadd.f32 0.0, %v706
        %v708 = vpop.f32.mrf.mxu0
        %v709 = vpop.f32.mrf.mxu0
        %v710 = vadd.f32 0.0, %v709
        %v711 = vpop.f32.mrf.mxu0
        %712 = vdwg.mxu0
        %v715 = vunpack.c.l.b16 %v521
        %v716 = vunpack.c.l.b16 %v522
        %v717 = vpack.c.b16 %v716, %v715
        %v724 = vunpack.c.l.b16 %v515
        %v725 = vunpack.c.h.b16 %v515
        %v726 = vunpack.c.l.b16 %v516
        %v727 = vunpack.c.h.b16 %v516
        %v728 = vunpack.c.l.b16 %v517
        %v729 = vunpack.c.h.b16 %v517
        %v730 = vunpack.c.l.b16 %v518
        %v731 = vunpack.c.h.b16 %v518
        %v732 = vunpack.c.l.b16 %v519
        %v733 = vunpack.c.h.b16 %v519
        %v734 = vunpack.c.l.b16 %v520
        %v735 = vunpack.c.h.b16 %v520
        %v736 = vpack.c.b16 %v730, %v724
        %v737 = vpack.c.b16 %v731, %v725
        %v738 = vpack.c.b16 %v732, %v726
        %v739 = vpack.c.b16 %v733, %v727
        %v740 = vpack.c.b16 %v734, %v728
        %v741 = vpack.c.b16 %v735, %v729
        %742 = vrot.lane.b32.xlu0 %v736, 17
        %v743 = vpop.permute.xlu0 %742
        %744 = vrot.lane.b32.xlu0 %v737, 17
        %v745 = vpop.permute.xlu0 %744
        %746 = vrot.lane.b32.xlu0 %v738, 17
        %v747 = vpop.permute.xlu0 %746
        %748 = vrot.lane.b32.xlu0 %v739, 17
        %v749 = vpop.permute.xlu0 %748
        %750 = vrot.lane.b32.xlu0 %v740, 17
        %v751 = vpop.permute.xlu0 %750
        %752 = vrot.lane.b32.xlu0 %v741, 17
        %v753 = vpop.permute.xlu0 %752
        %vm754 = vcmask 138240
        %v755 = vsel %vm754, %v743, %v745
        %v756 = vsel %vm754, %v745, %v747
        %v757 = vsel %vm754, %v747, %v749
        %v758 = vsel %vm754, %v749, %v751
        %v759 = vsel %vm754, %v751, %v753
        %v766 = vsel %vm584, %v717, 0
        %768 = vmatprep.subr.bf16.mxu0 0
        %769 = vmatpush1.bf16.msra.mxu0 0
        %770 = vmatprep.subr.bf16.mxu0 0
        %771 = vmatpush1.bf16.msra.mxu0 0
        %772 = vmatprep.subr.bf16.mxu0 0
        %773 = vmatpush1.bf16.msra.mxu0 0
        %774 = vmatprep.subr.bf16.mxu0 0
        %775 = vmatpush1.bf16.msra.mxu0 0
        %776 = vmatprep.subr.bf16.mxu0 0
        %777 = vmatpush1.bf16.msra.mxu0 0
        %778 = vmatprep.subr.bf16.mxu0 0
        %779 = vmatpush1.bf16.msra.mxu0 0
        %780 = vmatprep.subr.bf16.mxu0 0
        %781 = vmatpush1.bf16.msra.mxu0 0
        %782 = vmatprep.subr.bf16.mxu0 %v756
        %783 = vmatpush1.bf16.msra.mxu0 %v755
        %784 = vmatprep.subr.bf16.mxu0 0
        %785 = vmatpush2.bf16.msra.mxu0 0
        %786 = vmatprep.subr.bf16.mxu0 0
        %787 = vmatpush2.bf16.msra.mxu0 0
        %788 = vmatprep.subr.bf16.mxu0 0
        %789 = vmatpush2.bf16.msra.mxu0 0
        %790 = vmatprep.subr.bf16.mxu0 0
        %791 = vmatpush2.bf16.msra.mxu0 0
        %792 = vmatprep.subr.bf16.mxu0 0
        %793 = vmatpush2.bf16.msra.mxu0 0
        %794 = vmatprep.subr.bf16.mxu0 0
        %795 = vmatpush2.bf16.msra.mxu0 0
        %796 = vmatprep.subr.bf16.mxu0 0
        %797 = vmatpush2.bf16.msra.mxu0 0
        %798 = vmatprep.subr.bf16.mxu0 0
        %799 = vmatpush2.bf16.msra.mxu0 0
        %800 = vmatprep.mubr.bf16.mxu0 0
        %801 = vmatmul.mubr.bf16.gmra.mxu0 %v766
        %v802 = vpop.f32.mrf.mxu0
        %v803 = vadd.f32 %v623, %v802
        %v804 = vpop.f32.mrf.mxu0
        %v805 = vadd.f32 %v625, %v804
        %v806 = vpop.f32.mrf.mxu0
        %v807 = vadd.f32 %v627, %v806
        %v808 = vpop.f32.mrf.mxu0
        %v809 = vadd.f32 %v629, %v808
        %810 = vdwg.mxu0
        %811 = vmatprep.subr.bf16.mxu0 0
        %812 = vmatpush1.bf16.msra.mxu0 0
        %813 = vmatprep.subr.bf16.mxu0 0
        %814 = vmatpush1.bf16.msra.mxu0 0
        %815 = vmatprep.subr.bf16.mxu0 0
        %816 = vmatpush1.bf16.msra.mxu0 0
        %817 = vmatprep.subr.bf16.mxu0 0
        %818 = vmatpush1.bf16.msra.mxu0 0
        %819 = vmatprep.subr.bf16.mxu0 0
        %820 = vmatpush1.bf16.msra.mxu0 0
        %821 = vmatprep.subr.bf16.mxu0 0
        %822 = vmatpush1.bf16.msra.mxu0 0
        %823 = vmatprep.subr.bf16.mxu0 0
        %824 = vmatpush1.bf16.msra.mxu0 0
        %825 = vmatprep.subr.bf16.mxu0 %v758
        %826 = vmatpush1.bf16.msra.mxu0 %v757
        %827 = vmatprep.subr.bf16.mxu0 0
        %828 = vmatpush2.bf16.msra.mxu0 0
        %829 = vmatprep.subr.bf16.mxu0 0
        %830 = vmatpush2.bf16.msra.mxu0 0
        %831 = vmatprep.subr.bf16.mxu0 0
        %832 = vmatpush2.bf16.msra.mxu0 0
        %833 = vmatprep.subr.bf16.mxu0 0
        %834 = vmatpush2.bf16.msra.mxu0 0
        %835 = vmatprep.subr.bf16.mxu0 0
        %836 = vmatpush2.bf16.msra.mxu0 0
        %837 = vmatprep.subr.bf16.mxu0 0
        %838 = vmatpush2.bf16.msra.mxu0 0
        %839 = vmatprep.subr.bf16.mxu0 0
        %840 = vmatpush2.bf16.msra.mxu0 0
        %841 = vmatprep.subr.bf16.mxu0 0
        %842 = vmatpush2.bf16.msra.mxu0 0
        %843 = vmatprep.mubr.bf16.mxu0 0
        %844 = vmatmul.mubr.bf16.gmra.mxu0 %v766
        %v845 = vpop.f32.mrf.mxu0
        %v846 = vpop.f32.mrf.mxu0
        %v847 = vadd.f32 %v667, %v846
        %v848 = vpop.f32.mrf.mxu0
        %v849 = vpop.f32.mrf.mxu0
        %v850 = vadd.f32 %v670, %v849
        %851 = vdwg.mxu0
        %852 = vmatprep.subr.bf16.mxu0 0
        %853 = vmatpush1.bf16.msra.mxu0 0
        %854 = vmatprep.subr.bf16.mxu0 0
        %855 = vmatpush1.bf16.msra.mxu0 0
        %856 = vmatprep.subr.bf16.mxu0 0
        %857 = vmatpush1.bf16.msra.mxu0 0
        %858 = vmatprep.subr.bf16.mxu0 0
        %859 = vmatpush1.bf16.msra.mxu0 0
        %860 = vmatprep.subr.bf16.mxu0 0
        %861 = vmatpush1.bf16.msra.mxu0 0
        %862 = vmatprep.subr.bf16.mxu0 0
        %863 = vmatpush1.bf16.msra.mxu0 0
        %864 = vmatprep.subr.bf16.mxu0 0
        %865 = vmatpush1.bf16.msra.mxu0 0
        %866 = vmatprep.subr.bf16.mxu0 0
        %867 = vmatpush1.bf16.msra.mxu0 %v759
        %868 = vmatprep.subr.bf16.mxu0 0
        %869 = vmatpush2.bf16.msra.mxu0 0
        %870 = vmatprep.subr.bf16.mxu0 0
        %871 = vmatpush2.bf16.msra.mxu0 0
        %872 = vmatprep.subr.bf16.mxu0 0
        %873 = vmatpush2.bf16.msra.mxu0 0
        %874 = vmatprep.subr.bf16.mxu0 0
        %875 = vmatpush2.bf16.msra.mxu0 0
        %876 = vmatprep.subr.bf16.mxu0 0
        %877 = vmatpush2.bf16.msra.mxu0 0
        %878 = vmatprep.subr.bf16.mxu0 0
        %879 = vmatpush2.bf16.msra.mxu0 0
        %880 = vmatprep.subr.bf16.mxu0 0
        %881 = vmatpush2.bf16.msra.mxu0 0
        %882 = vmatprep.subr.bf16.mxu0 0
        %883 = vmatpush2.bf16.msra.mxu0 0
        %884 = vmatprep.mubr.bf16.mxu0 0
        %885 = vmatmul.mubr.bf16.gmra.mxu0 %v766
        %v886 = vpop.f32.mrf.mxu0
        %v887 = vadd.f32 %v707, %v886
        %v888 = vpop.f32.mrf.mxu0
        %v889 = vpop.f32.mrf.mxu0
        %v890 = vadd.f32 %v710, %v889
        %v891 = vpop.f32.mrf.mxu0
        %892 = vdwg.mxu0
        %v893 = vld [vmem:[#allocation4] sm:$0xff]
        %v894 = vld [vmem:[#allocation4 + $0x8] sm:$0xff]
        %v895 = vld [vmem:[#allocation4 + $0x10] sm:$0xff]
        %v896 = vld [vmem:[#allocation4 + $0x1c] sm:$0xff]
        %v897 = vld [vmem:[#allocation4 + $0x24] sm:$0xff]
        %v898 = vld [vmem:[#allocation4 + $0x2c] sm:$0xff]
        %s899 = scalar_lea.vmem [#allocation11], 16
        %v900 = vld [vmem:[%s899] sm:$0xf]
        %v901 = vld [vmem:[%s899 + $0x4] sm:$0xf]
        %v904 = vunpack.c.l.b16 %v900
        %v905 = vunpack.c.l.b16 %v901
        %v906 = vpack.c.b16 %v905, %v904
        %v913 = vunpack.c.l.b16 %v893
        %v914 = vunpack.c.h.b16 %v893
        %v915 = vunpack.c.l.b16 %v894
        %v916 = vunpack.c.h.b16 %v894
        %v917 = vunpack.c.l.b16 %v895
        %v918 = vunpack.c.h.b16 %v895
        %v919 = vunpack.c.l.b16 %v896
        %v920 = vunpack.c.h.b16 %v896
        %v921 = vunpack.c.l.b16 %v897
        %v922 = vunpack.c.h.b16 %v897
        %v923 = vunpack.c.l.b16 %v898
        %v924 = vunpack.c.h.b16 %v898
        %v925 = vpack.c.b16 %v919, %v913
        %v926 = vpack.c.b16 %v920, %v914
        %v927 = vpack.c.b16 %v921, %v915
        %v928 = vpack.c.b16 %v922, %v916
        %v929 = vpack.c.b16 %v923, %v917
        %v930 = vpack.c.b16 %v924, %v918
        %931 = vrot.lane.b32.xlu0 %v925, 15
        %v932 = vpop.permute.xlu0 %931
        %933 = vrot.lane.b32.xlu0 %v926, 15
        %v934 = vpop.permute.xlu0 %933
        %935 = vrot.lane.b32.xlu0 %v927, 15
        %v936 = vpop.permute.xlu0 %935
        %937 = vrot.lane.b32.xlu0 %v928, 15
        %v938 = vpop.permute.xlu0 %937
        %939 = vrot.lane.b32.xlu0 %v929, 15
        %v940 = vpop.permute.xlu0 %939
        %941 = vrot.lane.b32.xlu0 %v930, 15
        %v942 = vpop.permute.xlu0 %941
        %vm943 = vcmask 121856
        %v944 = vsel %vm943, %v932, %v934
        %v945 = vsel %vm943, %v934, %v936
        %v946 = vsel %vm943, %v936, %v938
        %v947 = vsel %vm943, %v938, %v940
        %v948 = vsel %vm943, %v940, %v942
        %v955 = vsel %vm584, %v906, 0
        %957 = vmatprep.subr.bf16.mxu0 0
        %958 = vmatpush1.bf16.msra.mxu0 0
        %959 = vmatprep.subr.bf16.mxu0 0
        %960 = vmatpush1.bf16.msra.mxu0 0
        %961 = vmatprep.subr.bf16.mxu0 0
        %962 = vmatpush1.bf16.msra.mxu0 0
        %963 = vmatprep.subr.bf16.mxu0 0
        %964 = vmatpush1.bf16.msra.mxu0 0
        %965 = vmatprep.subr.bf16.mxu0 0
        %966 = vmatpush1.bf16.msra.mxu0 0
        %967 = vmatprep.subr.bf16.mxu0 0
        %968 = vmatpush1.bf16.msra.mxu0 0
        %969 = vmatprep.subr.bf16.mxu0 0
        %970 = vmatpush1.bf16.msra.mxu0 0
        %971 = vmatprep.subr.bf16.mxu0 %v945
        %972 = vmatpush1.bf16.msra.mxu0 %v944
        %973 = vmatprep.subr.bf16.mxu0 0
        %974 = vmatpush2.bf16.msra.mxu0 0
        %975 = vmatprep.subr.bf16.mxu0 0
        %976 = vmatpush2.bf16.msra.mxu0 0
        %977 = vmatprep.subr.bf16.mxu0 0
        %978 = vmatpush2.bf16.msra.mxu0 0
        %979 = vmatprep.subr.bf16.mxu0 0
        %980 = vmatpush2.bf16.msra.mxu0 0
        %981 = vmatprep.subr.bf16.mxu0 0
        %982 = vmatpush2.bf16.msra.mxu0 0
        %983 = vmatprep.subr.bf16.mxu0 0
        %984 = vmatpush2.bf16.msra.mxu0 0
        %985 = vmatprep.subr.bf16.mxu0 0
        %986 = vmatpush2.bf16.msra.mxu0 0
        %987 = vmatprep.subr.bf16.mxu0 0
        %988 = vmatpush2.bf16.msra.mxu0 0
        %989 = vmatprep.mubr.bf16.mxu0 0
        %990 = vmatmul.mubr.bf16.gmra.mxu0 %v955
        %v991 = vpop.f32.mrf.mxu0
        %v992 = vadd.f32 0.0, %v991
        %v993 = vpop.f32.mrf.mxu0
        %v994 = vadd.f32 0.0, %v993
        %v995 = vpop.f32.mrf.mxu0
        %v996 = vadd.f32 0.0, %v995
        %v997 = vpop.f32.mrf.mxu0
        %v998 = vadd.f32 0.0, %v997
        %999 = vdwg.mxu0
        %1000 = vmatprep.subr.bf16.mxu0 0
        %1001 = vmatpush1.bf16.msra.mxu0 0
        %1002 = vmatprep.subr.bf16.mxu0 0
        %1003 = vmatpush1.bf16.msra.mxu0 0
        %1004 = vmatprep.subr.bf16.mxu0 0
        %1005 = vmatpush1.bf16.msra.mxu0 0
        %1006 = vmatprep.subr.bf16.mxu0 0
        %1007 = vmatpush1.bf16.msra.mxu0 0
        %1008 = vmatprep.subr.bf16.mxu0 0
        %1009 = vmatpush1.bf16.msra.mxu0 0
        %1010 = vmatprep.subr.bf16.mxu0 0
        %1011 = vmatpush1.bf16.msra.mxu0 0
        %1012 = vmatprep.subr.bf16.mxu0 0
        %1013 = vmatpush1.bf16.msra.mxu0 0
        %1014 = vmatprep.subr.bf16.mxu0 %v947
        %1015 = vmatpush1.bf16.msra.mxu0 %v946
        %1016 = vmatprep.subr.bf16.mxu0 0
        %1017 = vmatpush2.bf16.msra.mxu0 0
        %1018 = vmatprep.subr.bf16.mxu0 0
        %1019 = vmatpush2.bf16.msra.mxu0 0
        %1020 = vmatprep.subr.bf16.mxu0 0
        %1021 = vmatpush2.bf16.msra.mxu0 0
        %1022 = vmatprep.subr.bf16.mxu0 0
        %1023 = vmatpush2.bf16.msra.mxu0 0
        %1024 = vmatprep.subr.bf16.mxu0 0
        %1025 = vmatpush2.bf16.msra.mxu0 0
        %1026 = vmatprep.subr.bf16.mxu0 0
        %1027 = vmatpush2.bf16.msra.mxu0 0
        %1028 = vmatprep.subr.bf16.mxu0 0
        %1029 = vmatpush2.bf16.msra.mxu0 0
        %1030 = vmatprep.subr.bf16.mxu0 0
        %1031 = vmatpush2.bf16.msra.mxu0 0
        %1032 = vmatprep.mubr.bf16.mxu0 0
        %1033 = vmatmul.mubr.bf16.gmra.mxu0 %v955
        %v1034 = vpop.f32.mrf.mxu0
        %v1035 = vpop.f32.mrf.mxu0
        %v1036 = vadd.f32 0.0, %v1035
        %v1037 = vpop.f32.mrf.mxu0
        %v1038 = vpop.f32.mrf.mxu0
        %v1039 = vadd.f32 0.0, %v1038
        %1040 = vdwg.mxu0
        %1041 = vmatprep.subr.bf16.mxu0 0
        %1042 = vmatpush1.bf16.msra.mxu0 0
        %1043 = vmatprep.subr.bf16.mxu0 0
        %1044 = vmatpush1.bf16.msra.mxu0 0
        %1045 = vmatprep.subr.bf16.mxu0 0
        %1046 = vmatpush1.bf16.msra.mxu0 0
        %1047 = vmatprep.subr.bf16.mxu0 0
        %1048 = vmatpush1.bf16.msra.mxu0 0
        %1049 = vmatprep.subr.bf16.mxu0 0
        %1050 = vmatpush1.bf16.msra.mxu0 0
        %1051 = vmatprep.subr.bf16.mxu0 0
        %1052 = vmatpush1.bf16.msra.mxu0 0
        %1053 = vmatprep.subr.bf16.mxu0 0
        %1054 = vmatpush1.bf16.msra.mxu0 0
        %1055 = vmatprep.subr.bf16.mxu0 0
        %1056 = vmatpush1.bf16.msra.mxu0 %v948
        %1057 = vmatprep.subr.bf16.mxu0 0
        %1058 = vmatpush2.bf16.msra.mxu0 0
        %1059 = vmatprep.subr.bf16.mxu0 0
        %1060 = vmatpush2.bf16.msra.mxu0 0
        %1061 = vmatprep.subr.bf16.mxu0 0
        %1062 = vmatpush2.bf16.msra.mxu0 0
        %1063 = vmatprep.subr.bf16.mxu0 0
        %1064 = vmatpush2.bf16.msra.mxu0 0
        %1065 = vmatprep.subr.bf16.mxu0 0
        %1066 = vmatpush2.bf16.msra.mxu0 0
        %1067 = vmatprep.subr.bf16.mxu0 0
        %1068 = vmatpush2.bf16.msra.mxu0 0
        %1069 = vmatprep.subr.bf16.mxu0 0
        %1070 = vmatpush2.bf16.msra.mxu0 0
        %1071 = vmatprep.subr.bf16.mxu0 0
        %1072 = vmatpush2.bf16.msra.mxu0 0
        %1073 = vmatprep.mubr.bf16.mxu0 0
        %1074 = vmatmul.mubr.bf16.gmra.mxu0 %v955
        %v1075 = vpop.f32.mrf.mxu0
        %v1076 = vadd.f32 0.0, %v1075
        %v1077 = vpop.f32.mrf.mxu0
        %v1078 = vpop.f32.mrf.mxu0
        %v1079 = vadd.f32 0.0, %v1078
        %v1080 = vpop.f32.mrf.mxu0
        %1081 = vdwg.mxu0
        %v1082 = vadd.f32 %v803, %v992
        %v1083 = vadd.f32 %v805, %v994
        %v1084 = vadd.f32 %v847, %v1036
        %v1085 = vadd.f32 %v887, %v1076
        %v1086 = vadd.f32 %v807, %v996
        %v1087 = vadd.f32 %v809, %v998
        %v1088 = vadd.f32 %v850, %v1039
        %v1089 = vadd.f32 %v890, %v1079
        %s1090 = scalar_lea.vmem [#allocation11], 24
        %v1091 = vld [vmem:[%s1090] sm:$0xf]
        %v1092 = vld [vmem:[%s1090 + $0x4] sm:$0xf]
        %v1095 = vunpack.c.l.b16 %v1091
        %v1096 = vunpack.c.l.b16 %v1092
        %v1097 = vpack.c.b16 %v1096, %v1095
        %1098 = vrot.lane.b32.xlu0 %v736, 1
        %v1099 = vpop.permute.xlu0 %1098
        %1100 = vrot.lane.b32.xlu0 %v737, 1
        %v1101 = vpop.permute.xlu0 %1100
        %1102 = vrot.lane.b32.xlu0 %v738, 1
        %v1103 = vpop.permute.xlu0 %1102
        %1104 = vrot.lane.b32.xlu0 %v739, 1
        %v1105 = vpop.permute.xlu0 %1104
        %1106 = vrot.lane.b32.xlu0 %v740, 1
        %v1107 = vpop.permute.xlu0 %1106
        %1108 = vrot.lane.b32.xlu0 %v741, 1
        %v1109 = vpop.permute.xlu0 %1108
        %vm1110 = vcmask 7168
        %v1111 = vsel %vm1110, %v1099, %v1101
        %v1112 = vsel %vm1110, %v1101, %v1103
        %v1113 = vsel %vm1110, %v1103, %v1105
        %v1114 = vsel %vm1110, %v1105, %v1107
        %v1115 = vsel %vm1110, %v1107, %v1109
        %v1122 = vsel %vm584, %v1097, 0
        %1124 = vmatprep.subr.bf16.mxu0 0
        %1125 = vmatpush1.bf16.msra.mxu0 0
        %1126 = vmatprep.subr.bf16.mxu0 0
        %1127 = vmatpush1.bf16.msra.mxu0 0
        %1128 = vmatprep.subr.bf16.mxu0 0
        %1129 = vmatpush1.bf16.msra.mxu0 0
        %1130 = vmatprep.subr.bf16.mxu0 0
        %1131 = vmatpush1.bf16.msra.mxu0 0
        %1132 = vmatprep.subr.bf16.mxu0 0
        %1133 = vmatpush1.bf16.msra.mxu0 0
        %1134 = vmatprep.subr.bf16.mxu0 0
        %1135 = vmatpush1.bf16.msra.mxu0 0
        %1136 = vmatprep.subr.bf16.mxu0 0
        %1137 = vmatpush1.bf16.msra.mxu0 0
        %1138 = vmatprep.subr.bf16.mxu0 %v1112
        %1139 = vmatpush1.bf16.msra.mxu0 %v1111
        %1140 = vmatprep.subr.bf16.mxu0 0
        %1141 = vmatpush2.bf16.msra.mxu0 0
        %1142 = vmatprep.subr.bf16.mxu0 0
        %1143 = vmatpush2.bf16.msra.mxu0 0
        %1144 = vmatprep.subr.bf16.mxu0 0
        %1145 = vmatpush2.bf16.msra.mxu0 0
        %1146 = vmatprep.subr.bf16.mxu0 0
        %1147 = vmatpush2.bf16.msra.mxu0 0
        %1148 = vmatprep.subr.bf16.mxu0 0
        %1149 = vmatpush2.bf16.msra.mxu0 0
        %1150 = vmatprep.subr.bf16.mxu0 0
        %1151 = vmatpush2.bf16.msra.mxu0 0
        %1152 = vmatprep.subr.bf16.mxu0 0
        %1153 = vmatpush2.bf16.msra.mxu0 0
        %1154 = vmatprep.subr.bf16.mxu0 0
        %1155 = vmatpush2.bf16.msra.mxu0 0
        %1156 = vmatprep.mubr.bf16.mxu0 0
        %1157 = vmatmul.mubr.bf16.gmra.mxu0 %v1122
        %v1158 = vpop.f32.mrf.mxu0
        %v1159 = vadd.f32 0.0, %v1158
        %v1160 = vpop.f32.mrf.mxu0
        %v1161 = vadd.f32 0.0, %v1160
        %v1162 = vpop.f32.mrf.mxu0
        %v1163 = vadd.f32 0.0, %v1162
        %v1164 = vpop.f32.mrf.mxu0
        %v1165 = vadd.f32 0.0, %v1164
        %1166 = vdwg.mxu0
        %1167 = vmatprep.subr.bf16.mxu0 0
        %1168 = vmatpush1.bf16.msra.mxu0 0
        %1169 = vmatprep.subr.bf16.mxu0 0
        %1170 = vmatpush1.bf16.msra.mxu0 0
        %1171 = vmatprep.subr.bf16.mxu0 0
        %1172 = vmatpush1.bf16.msra.mxu0 0
        %1173 = vmatprep.subr.bf16.mxu0 0
        %1174 = vmatpush1.bf16.msra.mxu0 0
        %1175 = vmatprep.subr.bf16.mxu0 0
        %1176 = vmatpush1.bf16.msra.mxu0 0
        %1177 = vmatprep.subr.bf16.mxu0 0
        %1178 = vmatpush1.bf16.msra.mxu0 0
        %1179 = vmatprep.subr.bf16.mxu0 0
        %1180 = vmatpush1.bf16.msra.mxu0 0
        %1181 = vmatprep.subr.bf16.mxu0 %v1114
        %1182 = vmatpush1.bf16.msra.mxu0 %v1113
        %1183 = vmatprep.subr.bf16.mxu0 0
        %1184 = vmatpush2.bf16.msra.mxu0 0
        %1185 = vmatprep.subr.bf16.mxu0 0
        %1186 = vmatpush2.bf16.msra.mxu0 0
        %1187 = vmatprep.subr.bf16.mxu0 0
        %1188 = vmatpush2.bf16.msra.mxu0 0
        %1189 = vmatprep.subr.bf16.mxu0 0
        %1190 = vmatpush2.bf16.msra.mxu0 0
        %1191 = vmatprep.subr.bf16.mxu0 0
        %1192 = vmatpush2.bf16.msra.mxu0 0
        %1193 = vmatprep.subr.bf16.mxu0 0
        %1194 = vmatpush2.bf16.msra.mxu0 0
        %1195 = vmatprep.subr.bf16.mxu0 0
        %1196 = vmatpush2.bf16.msra.mxu0 0
        %1197 = vmatprep.subr.bf16.mxu0 0
        %1198 = vmatpush2.bf16.msra.mxu0 0
        %1199 = vmatprep.mubr.bf16.mxu0 0
        %1200 = vmatmul.mubr.bf16.gmra.mxu0 %v1122
        %v1201 = vpop.f32.mrf.mxu0
        %v1202 = vpop.f32.mrf.mxu0
        %v1203 = vadd.f32 0.0, %v1202
        %v1204 = vpop.f32.mrf.mxu0
        %v1205 = vpop.f32.mrf.mxu0
        %v1206 = vadd.f32 0.0, %v1205
        %1207 = vdwg.mxu0
        %1208 = vmatprep.subr.bf16.mxu0 0
        %1209 = vmatpush1.bf16.msra.mxu0 0
        %1210 = vmatprep.subr.bf16.mxu0 0
        %1211 = vmatpush1.bf16.msra.mxu0 0
        %1212 = vmatprep.subr.bf16.mxu0 0
        %1213 = vmatpush1.bf16.msra.mxu0 0
        %1214 = vmatprep.subr.bf16.mxu0 0
        %1215 = vmatpush1.bf16.msra.mxu0 0
        %1216 = vmatprep.subr.bf16.mxu0 0
        %1217 = vmatpush1.bf16.msra.mxu0 0
        %1218 = vmatprep.subr.bf16.mxu0 0
        %1219 = vmatpush1.bf16.msra.mxu0 0
        %1220 = vmatprep.subr.bf16.mxu0 0
        %1221 = vmatpush1.bf16.msra.mxu0 0
        %1222 = vmatprep.subr.bf16.mxu0 0
        %1223 = vmatpush1.bf16.msra.mxu0 %v1115
        %1224 = vmatprep.subr.bf16.mxu0 0
        %1225 = vmatpush2.bf16.msra.mxu0 0
        %1226 = vmatprep.subr.bf16.mxu0 0
        %1227 = vmatpush2.bf16.msra.mxu0 0
        %1228 = vmatprep.subr.bf16.mxu0 0
        %1229 = vmatpush2.bf16.msra.mxu0 0
        %1230 = vmatprep.subr.bf16.mxu0 0
        %1231 = vmatpush2.bf16.msra.mxu0 0
        %1232 = vmatprep.subr.bf16.mxu0 0
        %1233 = vmatpush2.bf16.msra.mxu0 0
        %1234 = vmatprep.subr.bf16.mxu0 0
        %1235 = vmatpush2.bf16.msra.mxu0 0
        %1236 = vmatprep.subr.bf16.mxu0 0
        %1237 = vmatpush2.bf16.msra.mxu0 0
        %1238 = vmatprep.subr.bf16.mxu0 0
        %1239 = vmatpush2.bf16.msra.mxu0 0
        %1240 = vmatprep.mubr.bf16.mxu0 0
        %1241 = vmatmul.mubr.bf16.gmra.mxu0 %v1122
        %v1242 = vpop.f32.mrf.mxu0
        %v1243 = vadd.f32 0.0, %v1242
        %v1244 = vpop.f32.mrf.mxu0
        %v1245 = vpop.f32.mrf.mxu0
        %v1246 = vadd.f32 0.0, %v1245
        %v1247 = vpop.f32.mrf.mxu0
        %1248 = vdwg.mxu0
        %v1249 = vadd.f32 %v1082, %v1159
        %v1250 = vadd.f32 %v1083, %v1161
        %v1251 = vadd.f32 %v1084, %v1203
        %v1252 = vadd.f32 %v1085, %v1243
        %v1253 = vadd.f32 %v1086, %v1163
        %v1254 = vadd.f32 %v1087, %v1165
        %v1255 = vadd.f32 %v1088, %v1206
        %v1256 = vadd.f32 %v1089, %v1246
        %v1257 = vld [vmem:[#allocation2 + $0x4] sm:$0xff]
        %v1258 = vld [vmem:[#allocation2 + $0xc] sm:$0xff]
        %v1259 = vld [vmem:[#allocation2 + $0x14] sm:$0xf]
        %v1260 = vld [vmem:[#allocation2 + $0x20] sm:$0xff]
        %v1261 = vld [vmem:[#allocation2 + $0x28] sm:$0xff]
        %v1262 = vld [vmem:[#allocation2 + $0x30] sm:$0xf]
        %s1263 = scalar_lea.vmem [#allocation11], 32
        %v1264 = vld [vmem:[%s1263] sm:$0xf]
        %v1265 = vld [vmem:[%s1263 + $0x4] sm:$0xf]
        %v1268 = vunpack.c.l.b16 %v1264
        %v1269 = vunpack.c.l.b16 %v1265
        %v1270 = vpack.c.b16 %v1269, %v1268
        %v1277 = vunpack.c.l.b16 %v1257
        %v1278 = vunpack.c.h.b16 %v1257
        %v1279 = vunpack.c.l.b16 %v1258
        %v1280 = vunpack.c.h.b16 %v1258
        %v1281 = vunpack.c.l.b16 %v1259
        %v1282 = vunpack.c.l.b16 %v1260
        %v1283 = vunpack.c.h.b16 %v1260
        %v1284 = vunpack.c.l.b16 %v1261
        %v1285 = vunpack.c.h.b16 %v1261
        %v1286 = vunpack.c.l.b16 %v1262
        %v1287 = vpack.c.b16 %v1282, %v1277
        %v1288 = vpack.c.b16 %v1283, %v1278
        %v1289 = vpack.c.b16 %v1284, %v1279
        %v1290 = vpack.c.b16 %v1285, %v1280
        %v1291 = vpack.c.b16 %v1286, %v1281
        %v1298 = vsel %vm584, %v1270, 0
        %1300 = vmatprep.subr.bf16.mxu0 0
        %1301 = vmatpush1.bf16.msra.mxu0 0
        %1302 = vmatprep.subr.bf16.mxu0 0
        %1303 = vmatpush1.bf16.msra.mxu0 0
        %1304 = vmatprep.subr.bf16.mxu0 0
        %1305 = vmatpush1.bf16.msra.mxu0 0
        %1306 = vmatprep.subr.bf16.mxu0 0
        %1307 = vmatpush1.bf16.msra.mxu0 0
        %1308 = vmatprep.subr.bf16.mxu0 0
        %1309 = vmatpush1.bf16.msra.mxu0 0
        %1310 = vmatprep.subr.bf16.mxu0 0
        %1311 = vmatpush1.bf16.msra.mxu0 0
        %1312 = vmatprep.subr.bf16.mxu0 0
        %1313 = vmatpush1.bf16.msra.mxu0 0
        %1314 = vmatprep.subr.bf16.mxu0 %v1288
        %1315 = vmatpush1.bf16.msra.mxu0 %v1287
        %1316 = vmatprep.subr.bf16.mxu0 0
        %1317 = vmatpush2.bf16.msra.mxu0 0
        %1318 = vmatprep.subr.bf16.mxu0 0
        %1319 = vmatpush2.bf16.msra.mxu0 0
        %1320 = vmatprep.subr.bf16.mxu0 0
        %1321 = vmatpush2.bf16.msra.mxu0 0
        %1322 = vmatprep.subr.bf16.mxu0 0
        %1323 = vmatpush2.bf16.msra.mxu0 0
        %1324 = vmatprep.subr.bf16.mxu0 0
        %1325 = vmatpush2.bf16.msra.mxu0 0
        %1326 = vmatprep.subr.bf16.mxu0 0
        %1327 = vmatpush2.bf16.msra.mxu0 0
        %1328 = vmatprep.subr.bf16.mxu0 0
        %1329 = vmatpush2.bf16.msra.mxu0 0
        %1330 = vmatprep.subr.bf16.mxu0 0
        %1331 = vmatpush2.bf16.msra.mxu0 0
        %1332 = vmatprep.mubr.bf16.mxu0 0
        %1333 = vmatmul.mubr.bf16.gmra.mxu0 %v1298
        %v1334 = vpop.f32.mrf.mxu0
        %v1335 = vadd.f32 0.0, %v1334
        %v1336 = vpop.f32.mrf.mxu0
        %v1337 = vadd.f32 0.0, %v1336
        %v1338 = vpop.f32.mrf.mxu0
        %v1339 = vadd.f32 0.0, %v1338
        %v1340 = vpop.f32.mrf.mxu0
        %v1341 = vadd.f32 0.0, %v1340
        %1342 = vdwg.mxu0
        %1343 = vmatprep.subr.bf16.mxu0 0
        %1344 = vmatpush1.bf16.msra.mxu0 0
        %1345 = vmatprep.subr.bf16.mxu0 0
        %1346 = vmatpush1.bf16.msra.mxu0 0
        %1347 = vmatprep.subr.bf16.mxu0 0
        %1348 = vmatpush1.bf16.msra.mxu0 0
        %1349 = vmatprep.subr.bf16.mxu0 0
        %1350 = vmatpush1.bf16.msra.mxu0 0
        %1351 = vmatprep.subr.bf16.mxu0 0
        %1352 = vmatpush1.bf16.msra.mxu0 0
        %1353 = vmatprep.subr.bf16.mxu0 0
        %1354 = vmatpush1.bf16.msra.mxu0 0
        %1355 = vmatprep.subr.bf16.mxu0 0
        %1356 = vmatpush1.bf16.msra.mxu0 0
        %1357 = vmatprep.subr.bf16.mxu0 %v1290
        %1358 = vmatpush1.bf16.msra.mxu0 %v1289
        %1359 = vmatprep.subr.bf16.mxu0 0
        %1360 = vmatpush2.bf16.msra.mxu0 0
        %1361 = vmatprep.subr.bf16.mxu0 0
        %1362 = vmatpush2.bf16.msra.mxu0 0
        %1363 = vmatprep.subr.bf16.mxu0 0
        %1364 = vmatpush2.bf16.msra.mxu0 0
        %1365 = vmatprep.subr.bf16.mxu0 0
        %1366 = vmatpush2.bf16.msra.mxu0 0
        %1367 = vmatprep.subr.bf16.mxu0 0
        %1368 = vmatpush2.bf16.msra.mxu0 0
        %1369 = vmatprep.subr.bf16.mxu0 0
        %1370 = vmatpush2.bf16.msra.mxu0 0
        %1371 = vmatprep.subr.bf16.mxu0 0
        %1372 = vmatpush2.bf16.msra.mxu0 0
        %1373 = vmatprep.subr.bf16.mxu0 0
        %1374 = vmatpush2.bf16.msra.mxu0 0
        %1375 = vmatprep.mubr.bf16.mxu0 0
        %1376 = vmatmul.mubr.bf16.gmra.mxu0 %v1298
        %v1377 = vpop.f32.mrf.mxu0
        %v1378 = vpop.f32.mrf.mxu0
        %v1379 = vadd.f32 0.0, %v1378
        %v1380 = vpop.f32.mrf.mxu0
        %v1381 = vpop.f32.mrf.mxu0
        %v1382 = vadd.f32 0.0, %v1381
        %1383 = vdwg.mxu0
        %1384 = vmatprep.subr.bf16.mxu0 0
        %1385 = vmatpush1.bf16.msra.mxu0 0
        %1386 = vmatprep.subr.bf16.mxu0 0
        %1387 = vmatpush1.bf16.msra.mxu0 0
        %1388 = vmatprep.subr.bf16.mxu0 0
        %1389 = vmatpush1.bf16.msra.mxu0 0
        %1390 = vmatprep.subr.bf16.mxu0 0
        %1391 = vmatpush1.bf16.msra.mxu0 0
        %1392 = vmatprep.subr.bf16.mxu0 0
        %1393 = vmatpush1.bf16.msra.mxu0 0
        %1394 = vmatprep.subr.bf16.mxu0 0
        %1395 = vmatpush1.bf16.msra.mxu0 0
        %1396 = vmatprep.subr.bf16.mxu0 0
        %1397 = vmatpush1.bf16.msra.mxu0 0
        %1398 = vmatprep.subr.bf16.mxu0 0
        %1399 = vmatpush1.bf16.msra.mxu0 %v1291
        %1400 = vmatprep.subr.bf16.mxu0 0
        %1401 = vmatpush2.bf16.msra.mxu0 0
        %1402 = vmatprep.subr.bf16.mxu0 0
        %1403 = vmatpush2.bf16.msra.mxu0 0
        %1404 = vmatprep.subr.bf16.mxu0 0
        %1405 = vmatpush2.bf16.msra.mxu0 0
        %1406 = vmatprep.subr.bf16.mxu0 0
        %1407 = vmatpush2.bf16.msra.mxu0 0
        %1408 = vmatprep.subr.bf16.mxu0 0
        %1409 = vmatpush2.bf16.msra.mxu0 0
        %1410 = vmatprep.subr.bf16.mxu0 0
        %1411 = vmatpush2.bf16.msra.mxu0 0
        %1412 = vmatprep.subr.bf16.mxu0 0
        %1413 = vmatpush2.bf16.msra.mxu0 0
        %1414 = vmatprep.subr.bf16.mxu0 0
        %1415 = vmatpush2.bf16.msra.mxu0 0
        %1416 = vmatprep.mubr.bf16.mxu0 0
        %1417 = vmatmul.mubr.bf16.gmra.mxu0 %v1298
        %v1418 = vpop.f32.mrf.mxu0
        %v1419 = vadd.f32 0.0, %v1418
        %v1420 = vpop.f32.mrf.mxu0
        %v1421 = vpop.f32.mrf.mxu0
        %v1422 = vadd.f32 0.0, %v1421
        %v1423 = vpop.f32.mrf.mxu0
        %1424 = vdwg.mxu0
        %v1425 = vadd.f32 %v1249, %v1335
        %v1426 = vadd.f32 %v1250, %v1337
        %v1427 = vadd.f32 %v1251, %v1379
        %v1428 = vadd.f32 %v1252, %v1419
        %v1429 = vadd.f32 %v1253, %v1339
        %v1430 = vadd.f32 %v1254, %v1341
        %v1431 = vadd.f32 %v1255, %v1382
        %v1432 = vadd.f32 %v1256, %v1422
        %v1433 = vld [vmem:[#allocation4 + $0x4] sm:$0xff]
        %v1434 = vld [vmem:[#allocation4 + $0xc] sm:$0xff]
        %v1435 = vld [vmem:[#allocation4 + $0x14] sm:$0xff]
        %v1436 = vld [vmem:[#allocation4 + $0x20] sm:$0xff]
        %v1437 = vld [vmem:[#allocation4 + $0x28] sm:$0xff]
        %v1438 = vld [vmem:[#allocation4 + $0x30] sm:$0xff]
        %s1439 = scalar_lea.vmem [#allocation11], 40
        %v1440 = vld [vmem:[%s1439] sm:$0xf]
        %v1441 = vld [vmem:[%s1439 + $0x4] sm:$0xf]
        %v1444 = vunpack.c.l.b16 %v1440
        %v1445 = vunpack.c.l.b16 %v1441
        %v1446 = vpack.c.b16 %v1445, %v1444
        %v1453 = vunpack.c.l.b16 %v1433
        %v1454 = vunpack.c.h.b16 %v1433
        %v1455 = vunpack.c.l.b16 %v1434
        %v1456 = vunpack.c.h.b16 %v1434
        %v1457 = vunpack.c.l.b16 %v1435
        %v1458 = vunpack.c.h.b16 %v1435
        %v1459 = vunpack.c.l.b16 %v1436
        %v1460 = vunpack.c.h.b16 %v1436
        %v1461 = vunpack.c.l.b16 %v1437
        %v1462 = vunpack.c.h.b16 %v1437
        %v1463 = vunpack.c.l.b16 %v1438
        %v1464 = vunpack.c.h.b16 %v1438
        %v1465 = vpack.c.b16 %v1459, %v1453
        %v1466 = vpack.c.b16 %v1460, %v1454
        %v1467 = vpack.c.b16 %v1461, %v1455
        %v1468 = vpack.c.b16 %v1462, %v1456
        %v1469 = vpack.c.b16 %v1463, %v1457
        %v1470 = vpack.c.b16 %v1464, %v1458
        %1471 = vrot.lane.b32.xlu0 %v1465, 127
        %v1472 = vpop.permute.xlu0 %1471
        %1473 = vrot.lane.b32.xlu0 %v1466, 127
        %v1474 = vpop.permute.xlu0 %1473
        %1475 = vrot.lane.b32.xlu0 %v1467, 127
        %v1476 = vpop.permute.xlu0 %1475
        %1477 = vrot.lane.b32.xlu0 %v1468, 127
        %v1478 = vpop.permute.xlu0 %1477
        %1479 = vrot.lane.b32.xlu0 %v1469, 127
        %v1480 = vpop.permute.xlu0 %1479
        %1481 = vrot.lane.b32.xlu0 %v1470, 127
        %v1482 = vpop.permute.xlu0 %1481
        %vm1483 = vcmask 1039360
        %v1484 = vsel %vm1483, %v1472, %v1474
        %v1485 = vsel %vm1483, %v1474, %v1476
        %v1486 = vsel %vm1483, %v1476, %v1478
        %v1487 = vsel %vm1483, %v1478, %v1480
        %v1488 = vsel %vm1483, %v1480, %v1482
        %v1495 = vsel %vm584, %v1446, 0
        %1497 = vmatprep.subr.bf16.mxu0 0
        %1498 = vmatpush1.bf16.msra.mxu0 0
        %1499 = vmatprep.subr.bf16.mxu0 0
        %1500 = vmatpush1.bf16.msra.mxu0 0
        %1501 = vmatprep.subr.bf16.mxu0 0
        %1502 = vmatpush1.bf16.msra.mxu0 0
        %1503 = vmatprep.subr.bf16.mxu0 0
        %1504 = vmatpush1.bf16.msra.mxu0 0
        %1505 = vmatprep.subr.bf16.mxu0 0
        %1506 = vmatpush1.bf16.msra.mxu0 0
        %1507 = vmatprep.subr.bf16.mxu0 0
        %1508 = vmatpush1.bf16.msra.mxu0 0
        %1509 = vmatprep.subr.bf16.mxu0 0
        %1510 = vmatpush1.bf16.msra.mxu0 0
        %1511 = vmatprep.subr.bf16.mxu0 %v1485
        %1512 = vmatpush1.bf16.msra.mxu0 %v1484
        %1513 = vmatprep.subr.bf16.mxu0 0
        %1514 = vmatpush2.bf16.msra.mxu0 0
        %1515 = vmatprep.subr.bf16.mxu0 0
        %1516 = vmatpush2.bf16.msra.mxu0 0
        %1517 = vmatprep.subr.bf16.mxu0 0
        %1518 = vmatpush2.bf16.msra.mxu0 0
        %1519 = vmatprep.subr.bf16.mxu0 0
        %1520 = vmatpush2.bf16.msra.mxu0 0
        %1521 = vmatprep.subr.bf16.mxu0 0
        %1522 = vmatpush2.bf16.msra.mxu0 0
        %1523 = vmatprep.subr.bf16.mxu0 0
        %1524 = vmatpush2.bf16.msra.mxu0 0
        %1525 = vmatprep.subr.bf16.mxu0 0
        %1526 = vmatpush2.bf16.msra.mxu0 0
        %1527 = vmatprep.subr.bf16.mxu0 0
        %1528 = vmatpush2.bf16.msra.mxu0 0
        %1529 = vmatprep.mubr.bf16.mxu0 0
        %1530 = vmatmul.mubr.bf16.gmra.mxu0 %v1495
        %v1531 = vpop.f32.mrf.mxu0
        %v1532 = vadd.f32 0.0, %v1531
        %v1533 = vpop.f32.mrf.mxu0
        %v1534 = vadd.f32 0.0, %v1533
        %v1535 = vpop.f32.mrf.mxu0
        %v1536 = vadd.f32 0.0, %v1535
        %v1537 = vpop.f32.mrf.mxu0
        %v1538 = vadd.f32 0.0, %v1537
        %1539 = vdwg.mxu0
        %1540 = vmatprep.subr.bf16.mxu0 0
        %1541 = vmatpush1.bf16.msra.mxu0 0
        %1542 = vmatprep.subr.bf16.mxu0 0
        %1543 = vmatpush1.bf16.msra.mxu0 0
        %1544 = vmatprep.subr.bf16.mxu0 0
        %1545 = vmatpush1.bf16.msra.mxu0 0
        %1546 = vmatprep.subr.bf16.mxu0 0
        %1547 = vmatpush1.bf16.msra.mxu0 0
        %1548 = vmatprep.subr.bf16.mxu0 0
        %1549 = vmatpush1.bf16.msra.mxu0 0
        %1550 = vmatprep.subr.bf16.mxu0 0
        %1551 = vmatpush1.bf16.msra.mxu0 0
        %1552 = vmatprep.subr.bf16.mxu0 0
        %1553 = vmatpush1.bf16.msra.mxu0 0
        %1554 = vmatprep.subr.bf16.mxu0 %v1487
        %1555 = vmatpush1.bf16.msra.mxu0 %v1486
        %1556 = vmatprep.subr.bf16.mxu0 0
        %1557 = vmatpush2.bf16.msra.mxu0 0
        %1558 = vmatprep.subr.bf16.mxu0 0
        %1559 = vmatpush2.bf16.msra.mxu0 0
        %1560 = vmatprep.subr.bf16.mxu0 0
        %1561 = vmatpush2.bf16.msra.mxu0 0
        %1562 = vmatprep.subr.bf16.mxu0 0
        %1563 = vmatpush2.bf16.msra.mxu0 0
        %1564 = vmatprep.subr.bf16.mxu0 0
        %1565 = vmatpush2.bf16.msra.mxu0 0
        %1566 = vmatprep.subr.bf16.mxu0 0
        %1567 = vmatpush2.bf16.msra.mxu0 0
        %1568 = vmatprep.subr.bf16.mxu0 0
        %1569 = vmatpush2.bf16.msra.mxu0 0
        %1570 = vmatprep.subr.bf16.mxu0 0
        %1571 = vmatpush2.bf16.msra.mxu0 0
        %1572 = vmatprep.mubr.bf16.mxu0 0
        %1573 = vmatmul.mubr.bf16.gmra.mxu0 %v1495
        %v1574 = vpop.f32.mrf.mxu0
        %v1575 = vpop.f32.mrf.mxu0
        %v1576 = vadd.f32 0.0, %v1575
        %v1577 = vpop.f32.mrf.mxu0
        %v1578 = vpop.f32.mrf.mxu0
        %v1579 = vadd.f32 0.0, %v1578
        %1580 = vdwg.mxu0
        %1581 = vmatprep.subr.bf16.mxu0 0
        %1582 = vmatpush1.bf16.msra.mxu0 0
        %1583 = vmatprep.subr.bf16.mxu0 0
        %1584 = vmatpush1.bf16.msra.mxu0 0
        %1585 = vmatprep.subr.bf16.mxu0 0
        %1586 = vmatpush1.bf16.msra.mxu0 0
        %1587 = vmatprep.subr.bf16.mxu0 0
        %1588 = vmatpush1.bf16.msra.mxu0 0
        %1589 = vmatprep.subr.bf16.mxu0 0
        %1590 = vmatpush1.bf16.msra.mxu0 0
        %1591 = vmatprep.subr.bf16.mxu0 0
        %1592 = vmatpush1.bf16.msra.mxu0 0
        %1593 = vmatprep.subr.bf16.mxu0 0
        %1594 = vmatpush1.bf16.msra.mxu0 0
        %1595 = vmatprep.subr.bf16.mxu0 0
        %1596 = vmatpush1.bf16.msra.mxu0 %v1488
        %1597 = vmatprep.subr.bf16.mxu0 0
        %1598 = vmatpush2.bf16.msra.mxu0 0
        %1599 = vmatprep.subr.bf16.mxu0 0
        %1600 = vmatpush2.bf16.msra.mxu0 0
        %1601 = vmatprep.subr.bf16.mxu0 0
        %1602 = vmatpush2.bf16.msra.mxu0 0
        %1603 = vmatprep.subr.bf16.mxu0 0
        %1604 = vmatpush2.bf16.msra.mxu0 0
        %1605 = vmatprep.subr.bf16.mxu0 0
        %1606 = vmatpush2.bf16.msra.mxu0 0
        %1607 = vmatprep.subr.bf16.mxu0 0
        %1608 = vmatpush2.bf16.msra.mxu0 0
        %1609 = vmatprep.subr.bf16.mxu0 0
        %1610 = vmatpush2.bf16.msra.mxu0 0
        %1611 = vmatprep.subr.bf16.mxu0 0
        %1612 = vmatpush2.bf16.msra.mxu0 0
        %1613 = vmatprep.mubr.bf16.mxu0 0
        %1614 = vmatmul.mubr.bf16.gmra.mxu0 %v1495
        %v1615 = vpop.f32.mrf.mxu0
        %v1616 = vadd.f32 0.0, %v1615
        %v1617 = vpop.f32.mrf.mxu0
        %v1618 = vpop.f32.mrf.mxu0
        %v1619 = vadd.f32 0.0, %v1618
        %v1620 = vpop.f32.mrf.mxu0
        %1621 = vdwg.mxu0
        %v1622 = vadd.f32 %v1425, %v1532
        %v1623 = vadd.f32 %v1426, %v1534
        %v1624 = vadd.f32 %v1427, %v1576
        %v1625 = vadd.f32 %v1428, %v1616
        %v1626 = vadd.f32 %v1429, %v1536
        %v1627 = vadd.f32 %v1430, %v1538
        %v1628 = vadd.f32 %v1431, %v1579
        %v1629 = vadd.f32 %v1432, %v1619
        %v1630 = vld [vmem:[#allocation3 + $0x4] sm:$0xff]
        %v1631 = vld [vmem:[#allocation3 + $0xc] sm:$0xff]
        %v1632 = vld [vmem:[#allocation3 + $0x14] sm:$0xff]
        %v1633 = vld [vmem:[#allocation3 + $0x20] sm:$0xff]
        %v1634 = vld [vmem:[#allocation3 + $0x28] sm:$0xff]
        %v1635 = vld [vmem:[#allocation3 + $0x30] sm:$0xff]
        %s1636 = scalar_lea.vmem [#allocation11], 48
        %v1637 = vld [vmem:[%s1636] sm:$0xf]
        %v1638 = vld [vmem:[%s1636 + $0x4] sm:$0xf]
        %v1641 = vunpack.c.l.b16 %v1637
        %v1642 = vunpack.c.l.b16 %v1638
        %v1643 = vpack.c.b16 %v1642, %v1641
        %v1650 = vunpack.c.l.b16 %v1630
        %v1651 = vunpack.c.h.b16 %v1630
        %v1652 = vunpack.c.l.b16 %v1631
        %v1653 = vunpack.c.h.b16 %v1631
        %v1654 = vunpack.c.l.b16 %v1632
        %v1655 = vunpack.c.h.b16 %v1632
        %v1656 = vunpack.c.l.b16 %v1633
        %v1657 = vunpack.c.h.b16 %v1633
        %v1658 = vunpack.c.l.b16 %v1634
        %v1659 = vunpack.c.h.b16 %v1634
        %v1660 = vunpack.c.l.b16 %v1635
        %v1661 = vunpack.c.h.b16 %v1635
        %v1662 = vpack.c.b16 %v1656, %v1650
        %v1663 = vpack.c.b16 %v1657, %v1651
        %v1664 = vpack.c.b16 %v1658, %v1652
        %v1665 = vpack.c.b16 %v1659, %v1653
        %v1666 = vpack.c.b16 %v1660, %v1654
        %v1667 = vpack.c.b16 %v1661, %v1655
        %1668 = vrot.lane.b32.xlu0 %v1662, 113
        %v1669 = vpop.permute.xlu0 %1668
        %1670 = vrot.lane.b32.xlu0 %v1663, 113
        %v1671 = vpop.permute.xlu0 %1670
        %1672 = vrot.lane.b32.xlu0 %v1664, 113
        %v1673 = vpop.permute.xlu0 %1672
        %1674 = vrot.lane.b32.xlu0 %v1665, 113
        %v1675 = vpop.permute.xlu0 %1674
        %1676 = vrot.lane.b32.xlu0 %v1666, 113
        %v1677 = vpop.permute.xlu0 %1676
        %1678 = vrot.lane.b32.xlu0 %v1667, 113
        %v1679 = vpop.permute.xlu0 %1678
        %vm1680 = vcmask 924672
        %v1681 = vsel %vm1680, %v1669, %v1671
        %v1682 = vsel %vm1680, %v1671, %v1673
        %v1683 = vsel %vm1680, %v1673, %v1675
        %v1684 = vsel %vm1680, %v1675, %v1677
        %v1685 = vsel %vm1680, %v1677, %v1679
        %v1692 = vsel %vm584, %v1643, 0
        %1694 = vmatprep.subr.bf16.mxu0 0
        %1695 = vmatpush1.bf16.msra.mxu0 0
        %1696 = vmatprep.subr.bf16.mxu0 0
        %1697 = vmatpush1.bf16.msra.mxu0 0
        %1698 = vmatprep.subr.bf16.mxu0 0
        %1699 = vmatpush1.bf16.msra.mxu0 0
        %1700 = vmatprep.subr.bf16.mxu0 0
        %1701 = vmatpush1.bf16.msra.mxu0 0
        %1702 = vmatprep.subr.bf16.mxu0 0
        %1703 = vmatpush1.bf16.msra.mxu0 0
        %1704 = vmatprep.subr.bf16.mxu0 0
        %1705 = vmatpush1.bf16.msra.mxu0 0
        %1706 = vmatprep.subr.bf16.mxu0 0
        %1707 = vmatpush1.bf16.msra.mxu0 0
        %1708 = vmatprep.subr.bf16.mxu0 %v1682
        %1709 = vmatpush1.bf16.msra.mxu0 %v1681
        %1710 = vmatprep.subr.bf16.mxu0 0
        %1711 = vmatpush2.bf16.msra.mxu0 0
        %1712 = vmatprep.subr.bf16.mxu0 0
        %1713 = vmatpush2.bf16.msra.mxu0 0
        %1714 = vmatprep.subr.bf16.mxu0 0
        %1715 = vmatpush2.bf16.msra.mxu0 0
        %1716 = vmatprep.subr.bf16.mxu0 0
        %1717 = vmatpush2.bf16.msra.mxu0 0
        %1718 = vmatprep.subr.bf16.mxu0 0
        %1719 = vmatpush2.bf16.msra.mxu0 0
        %1720 = vmatprep.subr.bf16.mxu0 0
        %1721 = vmatpush2.bf16.msra.mxu0 0
        %1722 = vmatprep.subr.bf16.mxu0 0
        %1723 = vmatpush2.bf16.msra.mxu0 0
        %1724 = vmatprep.subr.bf16.mxu0 0
        %1725 = vmatpush2.bf16.msra.mxu0 0
        %1726 = vmatprep.mubr.bf16.mxu0 0
        %1727 = vmatmul.mubr.bf16.gmra.mxu0 %v1692
        %v1728 = vpop.f32.mrf.mxu0
        %v1729 = vadd.f32 0.0, %v1728
        %v1730 = vpop.f32.mrf.mxu0
        %v1731 = vadd.f32 0.0, %v1730
        %v1732 = vpop.f32.mrf.mxu0
        %v1733 = vadd.f32 0.0, %v1732
        %v1734 = vpop.f32.mrf.mxu0
        %v1735 = vadd.f32 0.0, %v1734
        %1736 = vdwg.mxu0
        %1737 = vmatprep.subr.bf16.mxu0 0
        %1738 = vmatpush1.bf16.msra.mxu0 0
        %1739 = vmatprep.subr.bf16.mxu0 0
        %1740 = vmatpush1.bf16.msra.mxu0 0
        %1741 = vmatprep.subr.bf16.mxu0 0
        %1742 = vmatpush1.bf16.msra.mxu0 0
        %1743 = vmatprep.subr.bf16.mxu0 0
        %1744 = vmatpush1.bf16.msra.mxu0 0
        %1745 = vmatprep.subr.bf16.mxu0 0
        %1746 = vmatpush1.bf16.msra.mxu0 0
        %1747 = vmatprep.subr.bf16.mxu0 0
        %1748 = vmatpush1.bf16.msra.mxu0 0
        %1749 = vmatprep.subr.bf16.mxu0 0
        %1750 = vmatpush1.bf16.msra.mxu0 0
        %1751 = vmatprep.subr.bf16.mxu0 %v1684
        %1752 = vmatpush1.bf16.msra.mxu0 %v1683
        %1753 = vmatprep.subr.bf16.mxu0 0
        %1754 = vmatpush2.bf16.msra.mxu0 0
        %1755 = vmatprep.subr.bf16.mxu0 0
        %1756 = vmatpush2.bf16.msra.mxu0 0
        %1757 = vmatprep.subr.bf16.mxu0 0
        %1758 = vmatpush2.bf16.msra.mxu0 0
        %1759 = vmatprep.subr.bf16.mxu0 0
        %1760 = vmatpush2.bf16.msra.mxu0 0
        %1761 = vmatprep.subr.bf16.mxu0 0
        %1762 = vmatpush2.bf16.msra.mxu0 0
        %1763 = vmatprep.subr.bf16.mxu0 0
        %1764 = vmatpush2.bf16.msra.mxu0 0
        %1765 = vmatprep.subr.bf16.mxu0 0
        %1766 = vmatpush2.bf16.msra.mxu0 0
        %1767 = vmatprep.subr.bf16.mxu0 0
        %1768 = vmatpush2.bf16.msra.mxu0 0
        %1769 = vmatprep.mubr.bf16.mxu0 0
        %1770 = vmatmul.mubr.bf16.gmra.mxu0 %v1692
        %v1771 = vpop.f32.mrf.mxu0
        %v1772 = vpop.f32.mrf.mxu0
        %v1773 = vadd.f32 0.0, %v1772
        %v1774 = vpop.f32.mrf.mxu0
        %v1775 = vpop.f32.mrf.mxu0
        %v1776 = vadd.f32 0.0, %v1775
        %1777 = vdwg.mxu0
        %1778 = vmatprep.subr.bf16.mxu0 0
        %1779 = vmatpush1.bf16.msra.mxu0 0
        %1780 = vmatprep.subr.bf16.mxu0 0
        %1781 = vmatpush1.bf16.msra.mxu0 0
        %1782 = vmatprep.subr.bf16.mxu0 0
        %1783 = vmatpush1.bf16.msra.mxu0 0
        %1784 = vmatprep.subr.bf16.mxu0 0
        %1785 = vmatpush1.bf16.msra.mxu0 0
        %1786 = vmatprep.subr.bf16.mxu0 0
        %1787 = vmatpush1.bf16.msra.mxu0 0
        %1788 = vmatprep.subr.bf16.mxu0 0
        %1789 = vmatpush1.bf16.msra.mxu0 0
        %1790 = vmatprep.subr.bf16.mxu0 0
        %1791 = vmatpush1.bf16.msra.mxu0 0
        %1792 = vmatprep.subr.bf16.mxu0 0
        %1793 = vmatpush1.bf16.msra.mxu0 %v1685
        %1794 = vmatprep.subr.bf16.mxu0 0
        %1795 = vmatpush2.bf16.msra.mxu0 0
        %1796 = vmatprep.subr.bf16.mxu0 0
        %1797 = vmatpush2.bf16.msra.mxu0 0
        %1798 = vmatprep.subr.bf16.mxu0 0
        %1799 = vmatpush2.bf16.msra.mxu0 0
        %1800 = vmatprep.subr.bf16.mxu0 0
        %1801 = vmatpush2.bf16.msra.mxu0 0
        %1802 = vmatprep.subr.bf16.mxu0 0
        %1803 = vmatpush2.bf16.msra.mxu0 0
        %1804 = vmatprep.subr.bf16.mxu0 0
        %1805 = vmatpush2.bf16.msra.mxu0 0
        %1806 = vmatprep.subr.bf16.mxu0 0
        %1807 = vmatpush2.bf16.msra.mxu0 0
        %1808 = vmatprep.subr.bf16.mxu0 0
        %1809 = vmatpush2.bf16.msra.mxu0 0
        %1810 = vmatprep.mubr.bf16.mxu0 0
        %1811 = vmatmul.mubr.bf16.gmra.mxu0 %v1692
        %v1812 = vpop.f32.mrf.mxu0
        %v1813 = vadd.f32 0.0, %v1812
        %v1814 = vpop.f32.mrf.mxu0
        %v1815 = vpop.f32.mrf.mxu0
        %v1816 = vadd.f32 0.0, %v1815
        %v1817 = vpop.f32.mrf.mxu0
        %1818 = vdwg.mxu0
        %v1819 = vadd.f32 %v1622, %v1729
        %v1820 = vadd.f32 %v1623, %v1731
        %v1821 = vadd.f32 %v1624, %v1773
        %v1822 = vadd.f32 %v1625, %v1813
        %v1823 = vadd.f32 %v1626, %v1733
        %v1824 = vadd.f32 %v1627, %v1735
        %v1825 = vadd.f32 %v1628, %v1776
        %v1826 = vadd.f32 %v1629, %v1816
        %v1827 = vld [vmem:[#allocation2 + $0x4] sm:$0xff]
        %v1828 = vld [vmem:[#allocation2 + $0xc] sm:$0xff]
        %v1829 = vld [vmem:[#allocation2 + $0x14] sm:$0xff]
        %v1830 = vld [vmem:[#allocation2 + $0x20] sm:$0xff]
        %v1831 = vld [vmem:[#allocation2 + $0x28] sm:$0xff]
        %v1832 = vld [vmem:[#allocation2 + $0x30] sm:$0xff]
        %s1833 = scalar_lea.vmem [#allocation11], 56
        %v1834 = vld [vmem:[%s1833] sm:$0xf]
        %v1835 = vld [vmem:[%s1833 + $0x4] sm:$0xf]
        %v1838 = vunpack.c.l.b16 %v1834
        %v1839 = vunpack.c.l.b16 %v1835
        %v1840 = vpack.c.b16 %v1839, %v1838
        %v1847 = vunpack.c.l.b16 %v1827
        %v1848 = vunpack.c.h.b16 %v1827
        %v1849 = vunpack.c.l.b16 %v1828
        %v1850 = vunpack.c.h.b16 %v1828
        %v1851 = vunpack.c.l.b16 %v1829
        %v1852 = vunpack.c.h.b16 %v1829
        %v1853 = vunpack.c.l.b16 %v1830
        %v1854 = vunpack.c.h.b16 %v1830
        %v1855 = vunpack.c.l.b16 %v1831
        %v1856 = vunpack.c.h.b16 %v1831
        %v1857 = vunpack.c.l.b16 %v1832
        %v1858 = vunpack.c.h.b16 %v1832
        %v1859 = vpack.c.b16 %v1853, %v1847
        %v1860 = vpack.c.b16 %v1854, %v1848
        %v1861 = vpack.c.b16 %v1855, %v1849
        %v1862 = vpack.c.b16 %v1856, %v1850
        %v1863 = vpack.c.b16 %v1857, %v1851
        %v1864 = vpack.c.b16 %v1858, %v1852
        %1865 = vrot.lane.b32.xlu0 %v1859, 112
        %v1866 = vpop.permute.xlu0 %1865
        %1867 = vrot.lane.b32.xlu0 %v1860, 112
        %v1868 = vpop.permute.xlu0 %1867
        %1869 = vrot.lane.b32.xlu0 %v1861, 112
        %v1870 = vpop.permute.xlu0 %1869
        %1871 = vrot.lane.b32.xlu0 %v1862, 112
        %v1872 = vpop.permute.xlu0 %1871
        %1873 = vrot.lane.b32.xlu0 %v1863, 112
        %v1874 = vpop.permute.xlu0 %1873
        %1875 = vrot.lane.b32.xlu0 %v1864, 112
        %v1876 = vpop.permute.xlu0 %1875
        %vm1877 = vcmask 916480
        %v1878 = vsel %vm1877, %v1866, %v1868
        %v1879 = vsel %vm1877, %v1868, %v1870
        %v1880 = vsel %vm1877, %v1870, %v1872
        %v1881 = vsel %vm1877, %v1872, %v1874
        %v1882 = vsel %vm1877, %v1874, %v1876
        %v1889 = vsel %vm584, %v1840, 0
        %1891 = vmatprep.subr.bf16.mxu0 0
        %1892 = vmatpush1.bf16.msra.mxu0 0
        %1893 = vmatprep.subr.bf16.mxu0 0
        %1894 = vmatpush1.bf16.msra.mxu0 0
        %1895 = vmatprep.subr.bf16.mxu0 0
        %1896 = vmatpush1.bf16.msra.mxu0 0
        %1897 = vmatprep.subr.bf16.mxu0 0
        %1898 = vmatpush1.bf16.msra.mxu0 0
        %1899 = vmatprep.subr.bf16.mxu0 0
        %1900 = vmatpush1.bf16.msra.mxu0 0
        %1901 = vmatprep.subr.bf16.mxu0 0
        %1902 = vmatpush1.bf16.msra.mxu0 0
        %1903 = vmatprep.subr.bf16.mxu0 0
        %1904 = vmatpush1.bf16.msra.mxu0 0
        %1905 = vmatprep.subr.bf16.mxu0 %v1879
        %1906 = vmatpush1.bf16.msra.mxu0 %v1878
        %1907 = vmatprep.subr.bf16.mxu0 0
        %1908 = vmatpush2.bf16.msra.mxu0 0
        %1909 = vmatprep.subr.bf16.mxu0 0
        %1910 = vmatpush2.bf16.msra.mxu0 0
        %1911 = vmatprep.subr.bf16.mxu0 0
        %1912 = vmatpush2.bf16.msra.mxu0 0
        %1913 = vmatprep.subr.bf16.mxu0 0
        %1914 = vmatpush2.bf16.msra.mxu0 0
        %1915 = vmatprep.subr.bf16.mxu0 0
        %1916 = vmatpush2.bf16.msra.mxu0 0
        %1917 = vmatprep.subr.bf16.mxu0 0
        %1918 = vmatpush2.bf16.msra.mxu0 0
        %1919 = vmatprep.subr.bf16.mxu0 0
        %1920 = vmatpush2.bf16.msra.mxu0 0
        %1921 = vmatprep.subr.bf16.mxu0 0
        %1922 = vmatpush2.bf16.msra.mxu0 0
        %1923 = vmatprep.mubr.bf16.mxu0 0
        %1924 = vmatmul.mubr.bf16.gmra.mxu0 %v1889
        %v1925 = vpop.f32.mrf.mxu0
        %v1926 = vadd.f32 0.0, %v1925
        %v1927 = vpop.f32.mrf.mxu0
        %v1928 = vadd.f32 0.0, %v1927
        %v1929 = vpop.f32.mrf.mxu0
        %v1930 = vadd.f32 0.0, %v1929
        %v1931 = vpop.f32.mrf.mxu0
        %v1932 = vadd.f32 0.0, %v1931
        %1933 = vdwg.mxu0
        %1934 = vmatprep.subr.bf16.mxu0 0
        %1935 = vmatpush1.bf16.msra.mxu0 0
        %1936 = vmatprep.subr.bf16.mxu0 0
        %1937 = vmatpush1.bf16.msra.mxu0 0
        %1938 = vmatprep.subr.bf16.mxu0 0
        %1939 = vmatpush1.bf16.msra.mxu0 0
        %1940 = vmatprep.subr.bf16.mxu0 0
        %1941 = vmatpush1.bf16.msra.mxu0 0
        %1942 = vmatprep.subr.bf16.mxu0 0
        %1943 = vmatpush1.bf16.msra.mxu0 0
        %1944 = vmatprep.subr.bf16.mxu0 0
        %1945 = vmatpush1.bf16.msra.mxu0 0
        %1946 = vmatprep.subr.bf16.mxu0 0
        %1947 = vmatpush1.bf16.msra.mxu0 0
        %1948 = vmatprep.subr.bf16.mxu0 %v1881
        %1949 = vmatpush1.bf16.msra.mxu0 %v1880
        %1950 = vmatprep.subr.bf16.mxu0 0
        %1951 = vmatpush2.bf16.msra.mxu0 0
        %1952 = vmatprep.subr.bf16.mxu0 0
        %1953 = vmatpush2.bf16.msra.mxu0 0
        %1954 = vmatprep.subr.bf16.mxu0 0
        %1955 = vmatpush2.bf16.msra.mxu0 0
        %1956 = vmatprep.subr.bf16.mxu0 0
        %1957 = vmatpush2.bf16.msra.mxu0 0
        %1958 = vmatprep.subr.bf16.mxu0 0
        %1959 = vmatpush2.bf16.msra.mxu0 0
        %1960 = vmatprep.subr.bf16.mxu0 0
        %1961 = vmatpush2.bf16.msra.mxu0 0
        %1962 = vmatprep.subr.bf16.mxu0 0
        %1963 = vmatpush2.bf16.msra.mxu0 0
        %1964 = vmatprep.subr.bf16.mxu0 0
        %1965 = vmatpush2.bf16.msra.mxu0 0
        %1966 = vmatprep.mubr.bf16.mxu0 0
        %1967 = vmatmul.mubr.bf16.gmra.mxu0 %v1889
        %v1968 = vpop.f32.mrf.mxu0
        %v1969 = vpop.f32.mrf.mxu0
        %v1970 = vadd.f32 0.0, %v1969
        %v1971 = vpop.f32.mrf.mxu0
        %v1972 = vpop.f32.mrf.mxu0
        %v1973 = vadd.f32 0.0, %v1972
        %1974 = vdwg.mxu0
        %1975 = vmatprep.subr.bf16.mxu0 0
        %1976 = vmatpush1.bf16.msra.mxu0 0
        %1977 = vmatprep.subr.bf16.mxu0 0
        %1978 = vmatpush1.bf16.msra.mxu0 0
        %1979 = vmatprep.subr.bf16.mxu0 0
        %1980 = vmatpush1.bf16.msra.mxu0 0
        %1981 = vmatprep.subr.bf16.mxu0 0
        %1982 = vmatpush1.bf16.msra.mxu0 0
        %1983 = vmatprep.subr.bf16.mxu0 0
        %1984 = vmatpush1.bf16.msra.mxu0 0
        %1985 = vmatprep.subr.bf16.mxu0 0
        %1986 = vmatpush1.bf16.msra.mxu0 0
        %1987 = vmatprep.subr.bf16.mxu0 0
        %1988 = vmatpush1.bf16.msra.mxu0 0
        %1989 = vmatprep.subr.bf16.mxu0 0
        %1990 = vmatpush1.bf16.msra.mxu0 %v1882
        %1991 = vmatprep.subr.bf16.mxu0 0
        %1992 = vmatpush2.bf16.msra.mxu0 0
        %1993 = vmatprep.subr.bf16.mxu0 0
        %1994 = vmatpush2.bf16.msra.mxu0 0
        %1995 = vmatprep.subr.bf16.mxu0 0
        %1996 = vmatpush2.bf16.msra.mxu0 0
        %1997 = vmatprep.subr.bf16.mxu0 0
        %1998 = vmatpush2.bf16.msra.mxu0 0
        %1999 = vmatprep.subr.bf16.mxu0 0
        %2000 = vmatpush2.bf16.msra.mxu0 0
        %2001 = vmatprep.subr.bf16.mxu0 0
        %2002 = vmatpush2.bf16.msra.mxu0 0
        %2003 = vmatprep.subr.bf16.mxu0 0
        %2004 = vmatpush2.bf16.msra.mxu0 0
        %2005 = vmatprep.subr.bf16.mxu0 0
        %2006 = vmatpush2.bf16.msra.mxu0 0
        %2007 = vmatprep.mubr.bf16.mxu0 0
        %2008 = vmatmul.mubr.bf16.gmra.mxu0 %v1889
        %v2009 = vpop.f32.mrf.mxu0
        %v2010 = vadd.f32 0.0, %v2009
        %v2011 = vpop.f32.mrf.mxu0
        %v2012 = vpop.f32.mrf.mxu0
        %v2013 = vadd.f32 0.0, %v2012
        %v2014 = vpop.f32.mrf.mxu0
        %2015 = vdwg.mxu0
        %v2016 = vadd.f32 %v1819, %v1926
        %v2017 = vadd.f32 %v1820, %v1928
        %v2018 = vadd.f32 %v1821, %v1970
        %v2019 = vadd.f32 %v1822, %v2010
        %v2020 = vadd.f32 %v1823, %v1930
        %v2021 = vadd.f32 %v1824, %v1932
        %v2022 = vadd.f32 %v1825, %v1973
        %v2023 = vadd.f32 %v1826, %v2013
        %s2024 = scalar_lea.vmem [#allocation11], 64
        %v2025 = vld [vmem:[%s2024] sm:$0xf]
        %v2026 = vld [vmem:[%s2024 + $0x4] sm:$0xf]
        %v2029 = vunpack.c.l.b16 %v2025
        %v2030 = vunpack.c.l.b16 %v2026
        %v2031 = vpack.c.b16 %v2030, %v2029
        %2032 = vrot.lane.b32.xlu0 %v1465, 111
        %v2033 = vpop.permute.xlu0 %2032
        %2034 = vrot.lane.b32.xlu0 %v1466, 111
        %v2035 = vpop.permute.xlu0 %2034
        %2036 = vrot.lane.b32.xlu0 %v1467, 111
        %v2037 = vpop.permute.xlu0 %2036
        %2038 = vrot.lane.b32.xlu0 %v1468, 111
        %v2039 = vpop.permute.xlu0 %2038
        %2040 = vrot.lane.b32.xlu0 %v1469, 111
        %v2041 = vpop.permute.xlu0 %2040
        %2042 = vrot.lane.b32.xlu0 %v1470, 111
        %v2043 = vpop.permute.xlu0 %2042
        %vm2044 = vcmask 908288
        %v2045 = vsel %vm2044, %v2033, %v2035
        %v2046 = vsel %vm2044, %v2035, %v2037
        %v2047 = vsel %vm2044, %v2037, %v2039
        %v2048 = vsel %vm2044, %v2039, %v2041
        %v2049 = vsel %vm2044, %v2041, %v2043
        %v2056 = vsel %vm584, %v2031, 0
        %2058 = vmatprep.subr.bf16.mxu0 0
        %2059 = vmatpush1.bf16.msra.mxu0 0
        %2060 = vmatprep.subr.bf16.mxu0 0
        %2061 = vmatpush1.bf16.msra.mxu0 0
        %2062 = vmatprep.subr.bf16.mxu0 0
        %2063 = vmatpush1.bf16.msra.mxu0 0
        %2064 = vmatprep.subr.bf16.mxu0 0
        %2065 = vmatpush1.bf16.msra.mxu0 0
        %2066 = vmatprep.subr.bf16.mxu0 0
        %2067 = vmatpush1.bf16.msra.mxu0 0
        %2068 = vmatprep.subr.bf16.mxu0 0
        %2069 = vmatpush1.bf16.msra.mxu0 0
        %2070 = vmatprep.subr.bf16.mxu0 0
        %2071 = vmatpush1.bf16.msra.mxu0 0
        %2072 = vmatprep.subr.bf16.mxu0 %v2046
        %2073 = vmatpush1.bf16.msra.mxu0 %v2045
        %2074 = vmatprep.subr.bf16.mxu0 0
        %2075 = vmatpush2.bf16.msra.mxu0 0
        %2076 = vmatprep.subr.bf16.mxu0 0
        %2077 = vmatpush2.bf16.msra.mxu0 0
        %2078 = vmatprep.subr.bf16.mxu0 0
        %2079 = vmatpush2.bf16.msra.mxu0 0
        %2080 = vmatprep.subr.bf16.mxu0 0
        %2081 = vmatpush2.bf16.msra.mxu0 0
        %2082 = vmatprep.subr.bf16.mxu0 0
        %2083 = vmatpush2.bf16.msra.mxu0 0
        %2084 = vmatprep.subr.bf16.mxu0 0
        %2085 = vmatpush2.bf16.msra.mxu0 0
        %2086 = vmatprep.subr.bf16.mxu0 0
        %2087 = vmatpush2.bf16.msra.mxu0 0
        %2088 = vmatprep.subr.bf16.mxu0 0
        %2089 = vmatpush2.bf16.msra.mxu0 0
        %2090 = vmatprep.mubr.bf16.mxu0 0
        %2091 = vmatmul.mubr.bf16.gmra.mxu0 %v2056
        %v2092 = vpop.f32.mrf.mxu0
        %v2093 = vadd.f32 0.0, %v2092
        %v2094 = vpop.f32.mrf.mxu0
        %v2095 = vadd.f32 0.0, %v2094
        %v2096 = vpop.f32.mrf.mxu0
        %v2097 = vadd.f32 0.0, %v2096
        %v2098 = vpop.f32.mrf.mxu0
        %v2099 = vadd.f32 0.0, %v2098
        %2100 = vdwg.mxu0
        %2101 = vmatprep.subr.bf16.mxu0 0
        %2102 = vmatpush1.bf16.msra.mxu0 0
        %2103 = vmatprep.subr.bf16.mxu0 0
        %2104 = vmatpush1.bf16.msra.mxu0 0
        %2105 = vmatprep.subr.bf16.mxu0 0
        %2106 = vmatpush1.bf16.msra.mxu0 0
        %2107 = vmatprep.subr.bf16.mxu0 0
        %2108 = vmatpush1.bf16.msra.mxu0 0
        %2109 = vmatprep.subr.bf16.mxu0 0
        %2110 = vmatpush1.bf16.msra.mxu0 0
        %2111 = vmatprep.subr.bf16.mxu0 0
        %2112 = vmatpush1.bf16.msra.mxu0 0
        %2113 = vmatprep.subr.bf16.mxu0 0
        %2114 = vmatpush1.bf16.msra.mxu0 0
        %2115 = vmatprep.subr.bf16.mxu0 %v2048
        %2116 = vmatpush1.bf16.msra.mxu0 %v2047
        %2117 = vmatprep.subr.bf16.mxu0 0
        %2118 = vmatpush2.bf16.msra.mxu0 0
        %2119 = vmatprep.subr.bf16.mxu0 0
        %2120 = vmatpush2.bf16.msra.mxu0 0
        %2121 = vmatprep.subr.bf16.mxu0 0
        %2122 = vmatpush2.bf16.msra.mxu0 0
        %2123 = vmatprep.subr.bf16.mxu0 0
        %2124 = vmatpush2.bf16.msra.mxu0 0
        %2125 = vmatprep.subr.bf16.mxu0 0
        %2126 = vmatpush2.bf16.msra.mxu0 0
        %2127 = vmatprep.subr.bf16.mxu0 0
        %2128 = vmatpush2.bf16.msra.mxu0 0
        %2129 = vmatprep.subr.bf16.mxu0 0
        %2130 = vmatpush2.bf16.msra.mxu0 0
        %2131 = vmatprep.subr.bf16.mxu0 0
        %2132 = vmatpush2.bf16.msra.mxu0 0
        %2133 = vmatprep.mubr.bf16.mxu0 0
        %2134 = vmatmul.mubr.bf16.gmra.mxu0 %v2056
        %v2135 = vpop.f32.mrf.mxu0
        %v2136 = vpop.f32.mrf.mxu0
        %v2137 = vadd.f32 0.0, %v2136
        %v2138 = vpop.f32.mrf.mxu0
        %v2139 = vpop.f32.mrf.mxu0
        %v2140 = vadd.f32 0.0, %v2139
        %2141 = vdwg.mxu0
        %2142 = vmatprep.subr.bf16.mxu0 0
        %2143 = vmatpush1.bf16.msra.mxu0 0
        %2144 = vmatprep.subr.bf16.mxu0 0
        %2145 = vmatpush1.bf16.msra.mxu0 0
        %2146 = vmatprep.subr.bf16.mxu0 0
        %2147 = vmatpush1.bf16.msra.mxu0 0
        %2148 = vmatprep.subr.bf16.mxu0 0
        %2149 = vmatpush1.bf16.msra.mxu0 0
        %2150 = vmatprep.subr.bf16.mxu0 0
        %2151 = vmatpush1.bf16.msra.mxu0 0
        %2152 = vmatprep.subr.bf16.mxu0 0
        %2153 = vmatpush1.bf16.msra.mxu0 0
        %2154 = vmatprep.subr.bf16.mxu0 0
        %2155 = vmatpush1.bf16.msra.mxu0 0
        %2156 = vmatprep.subr.bf16.mxu0 0
        %2157 = vmatpush1.bf16.msra.mxu0 %v2049
        %2158 = vmatprep.subr.bf16.mxu0 0
        %2159 = vmatpush2.bf16.msra.mxu0 0
        %2160 = vmatprep.subr.bf16.mxu0 0
        %2161 = vmatpush2.bf16.msra.mxu0 0
        %2162 = vmatprep.subr.bf16.mxu0 0
        %2163 = vmatpush2.bf16.msra.mxu0 0
        %2164 = vmatprep.subr.bf16.mxu0 0
        %2165 = vmatpush2.bf16.msra.mxu0 0
        %2166 = vmatprep.subr.bf16.mxu0 0
        %2167 = vmatpush2.bf16.msra.mxu0 0
        %2168 = vmatprep.subr.bf16.mxu0 0
        %2169 = vmatpush2.bf16.msra.mxu0 0
        %2170 = vmatprep.subr.bf16.mxu0 0
        %2171 = vmatpush2.bf16.msra.mxu0 0
        %2172 = vmatprep.subr.bf16.mxu0 0
        %2173 = vmatpush2.bf16.msra.mxu0 0
        %2174 = vmatprep.mubr.bf16.mxu0 0
        %2175 = vmatmul.mubr.bf16.gmra.mxu0 %v2056
        %v2176 = vpop.f32.mrf.mxu0
        %v2177 = vadd.f32 0.0, %v2176
        %v2178 = vpop.f32.mrf.mxu0
        %v2179 = vpop.f32.mrf.mxu0
        %v2180 = vadd.f32 0.0, %v2179
        %v2181 = vpop.f32.mrf.mxu0
        %2182 = vdwg.mxu0
        %v2183 = vadd.f32 %v2016, %v2093
        %v2184 = vadd.f32 %v2017, %v2095
        %v2185 = vadd.f32 %v2018, %v2137
        %v2186 = vadd.f32 %v2019, %v2177
        %v2187 = vadd.f32 %v2020, %v2097
        %v2188 = vadd.f32 %v2021, %v2099
        %v2189 = vadd.f32 %v2022, %v2140
        %v2190 = vadd.f32 %v2023, %v2180
        %v2191 = vld [vmem:[%s3] sm:$0xff]
        %v2192 = vld [vmem:[%s3 + $0x8] sm:$0xff]
        %2194 = vset.pattern.permute.xlu0 0
        %2195 = vperm.xlu0 %2194, %v2191
        %v2196 = vpop.permute.xlu0 %2195
        %2199 = vset.pattern.permute.xlu0 0
        %2200 = vperm.xlu0 %2199, %v2192
        %v2201 = vpop.permute.xlu0 %2200
        %v2203 = vadd.f32 %v2183, %v2196
        %v2204 = vadd.f32 %v2184, %v2196
        %v2205 = vadd.f32 %v2185, %v2196
        %v2206 = vadd.f32 %v2186, %v2196
        %v2207 = vadd.f32 %v2187, %v2201
        %v2208 = vadd.f32 %v2188, %v2201
        %v2209 = vadd.f32 %v2189, %v2201
        %v2210 = vadd.f32 %v2190, %v2201
        %v2211 = vmax.f32 %v2203, 0.0
        %v2212 = vmax.f32 %v2204, 0.0
        %v2213 = vmax.f32 %v2205, 0.0
        %v2214 = vmax.f32 %v2206, 0.0
        %v2215 = vmax.f32 %v2207, 0.0
        %v2216 = vmax.f32 %v2208, 0.0
        %v2217 = vmax.f32 %v2209, 0.0
        %v2218 = vmax.f32 %v2210, 0.0
        %vm2219 = vcmask 8192
        %2220 = vst.msk [vmem:[#allocation5] sm:$0x1] %vm2219, 0.0
        %2221 = vst.msk [vmem:[#allocation5 + $0x11] sm:$0x1] %vm2219, 0.0
        %v2222 = vadd.f32 %v2211, %v2212
        %2223 = vadd.xlane.f32.xlu0 %v2222
        %v2224 = vpop.xlane.xlu0 %2223
        %v2225 = vadd.f32 %v2215, %v2216
        %2226 = vadd.xlane.f32.xlu0 %v2225
        %v2227 = vpop.xlane.xlu0 %2226
        %v2228 = vrcp.pop 256.0
        %v2229 = vmul.f32 %v2224, %v2228
        %v2230 = vmul.f32 %v2227, %v2228
        %vm2231 = vcmask 7168
        %2232 = vst.msk [vmem:[#allocation5 + $0x1] sm:$0xff] %vm2231, %v2229
        %2233 = vst.msk [vmem:[#allocation5 + $0x9] sm:$0xff] %vm2231, %v2230
        %v2234 = vadd.f32 %v2213, %v2214
        %2235 = vadd.xlane.f32.xlu0 %v2234
        %v2236 = vpop.xlane.xlu0 %2235
        %v2237 = vadd.f32 %v2217, %v2218
        %2238 = vadd.xlane.f32.xlu0 %v2237
        %v2239 = vpop.xlane.xlu0 %2238
        %v2240 = vmul.f32 %v2236, %v2228
        %v2241 = vmul.f32 %v2239, %v2228
        %vm2242 = vcmask 15368
        %2243 = vst.msk [vmem:[#allocation5 + $0x1] sm:$0xff] %vm2242, %v2240
        %2244 = vst.msk [vmem:[#allocation5 + $0x9] sm:$0xff] %vm2242, %v2241
        %v2245 = vld [vmem:[%s5] sm:$0x1]
        %v2246 = vld [vmem:[#allocation5] sm:$0xff]
        %v2247 = vld [vmem:[#allocation5 + $0x8] sm:$0xff]
        %s2249 = vtos %v2245
        %v2250 = vstv %s2249
        %v2252 = vmul.f32 %v2250, %v2246
        %v2253 = vmul.f32 %v2250, %v2247
        %v2254 = vadd.f32 %v2252, 0.0
        %v2255 = vadd.f32 %v2253, 0.0
        %v2256 = vld [vmem:[%s5 + $0x1] sm:$0x1]
        %v2257 = vld [vmem:[#allocation5 + $0x1] sm:$0xff]
        %v2258 = vld [vmem:[#allocation5 + $0x9] sm:$0xff]
        %s2260 = vtos %v2256
        %v2261 = vstv %s2260
        %v2263 = vmul.f32 %v2261, %v2257
        %v2264 = vmul.f32 %v2261, %v2258
        %v2265 = vadd.f32 %v2254, %v2263
        %v2266 = vadd.f32 %v2255, %v2264
        %v2267 = vld [vmem:[%s5 + $0x2] sm:$0x1]
        %v2268 = vld [vmem:[#allocation5 + $0x2] sm:$0xff]
        %v2269 = vld [vmem:[#allocation5 + $0xa] sm:$0xff]
        %s2271 = vtos %v2267
        %v2272 = vstv %s2271
        %v2274 = vmul.f32 %v2272, %v2268
        %v2275 = vmul.f32 %v2272, %v2269
        %v2276 = vadd.f32 %v2265, %v2274
        %v2277 = vadd.f32 %v2266, %v2275
        %v2278 = vxor.u32 %v2276, 2147483648
        %v2279 = vxor.u32 %v2277, 2147483648
        %v2280 = vmul.f32 %v2278, 1.442695
        %v2281 = vpow.pop %v2280
        %v2282 = vmul.f32 %v2279, 1.442695
        %v2283 = vpow.pop %v2282
        %v2284 = vadd.f32 %v2281, 1.0
        %v2285 = vadd.f32 %v2283, 1.0
        %v2286 = vrcp.pop %v2284
        %v2287 = vmul.f32 1.0, %v2286
        %v2288 = vrcp.pop %v2285
        %v2289 = vmul.f32 1.0, %v2288
        %2291 = vset.pattern.permute.xlu0 0
        %2292 = vperm.xlu0 %2291, %v2287
        %v2293 = vpop.permute.xlu0 %2292
        %2296 = vset.pattern.permute.xlu0 0
        %2297 = vperm.xlu0 %2296, %v2289
        %v2298 = vpop.permute.xlu0 %2297
        %v2300 = vmul.f32 %v2211, %v2293
        %v2301 = vmul.f32 %v2212, %v2293
        %v2302 = vmul.f32 %v2215, %v2298
        %v2303 = vmul.f32 %v2216, %v2298
        %2304 = vst [vmem:[%s325] sm:$0xff] %v2300
        %2305 = vst [vmem:[%s325 + $0x8] sm:$0xff] %v2301
        %2306 = vst [vmem:[%s325 + $0x10] sm:$0xff] %v2302
        %2307 = vst [vmem:[%s325 + $0x18] sm:$0xff] %v2303
        %2308 = vset.pattern.permute.xlu0 1
        %2309 = vperm.xlu0 %2308, %v2287
        %v2310 = vpop.permute.xlu0 %2309
        %2312 = vset.pattern.permute.xlu0 1
        %2313 = vperm.xlu0 %2312, %v2289
        %v2314 = vpop.permute.xlu0 %2313
        %v2316 = vmul.f32 %v2213, %v2310
        %v2317 = vmul.f32 %v2214, %v2310
        %v2318 = vmul.f32 %v2217, %v2314
        %v2319 = vmul.f32 %v2218, %v2314
        %s2320 = scalar_lea.vmem %s325, 32 [#allocation12]
        %2321 = vst [vmem:[%s2320] sm:$0xff] %v2316
        %2322 = vst [vmem:[%s2320 + $0x8] sm:$0xff] %v2317
        %2323 = vst [vmem:[%s2320 + $0x10] sm:$0xff] %v2318
        %2324 = vst [vmem:[%s2320 + $0x18] sm:$0xff] %v2319
        %s2325 = sand.u32 %s170, 1
        %s2326 = scalar_lea.sflag [#allocation8], %s2325
        %s2327 = sand.u32 %s170, 1
        %s2328 = smul.addr %s2327, 64
        %s2329 = scalar_lea.vmem [#allocation12], %s2328
        // Predicated region
        $region57: #{tpu_custom_call.1} parent=43 // pred_check
          %p2330 = pneg %p180
        $region58: #{tpu_custom_call.1} parent=43 // pred_check_branch
          %2332 = sbr.rel (%p2330) target = $region60
        $region59: #{tpu_custom_call.1} parent=43 // pred_region
          %s2333 = smul.u32 2, %s26
          %s2335 = ssub.s32 1024, 1024
          %2336 = vsyncadd %s2326, %s2335
          %s2337 = smul.addr %s2333, 4
          %s2338 = smul.addr %s2337, 128
          %s2339 = scalar_lea.hbm %s6, %s2338
          %s2340 = sshll.u32 %s2329, 4
          %s2341 = int_to_ptr.vmem [resolvable:$true] %s2340
          %2346 = dma.vmem_to_hbm [thread:$0]  %s2341, 1024, %s2339, %s2326, 256, 256, 16
        $region60: #{tpu_custom_call.1} parent=43 // pred_fallthru
          _
      $region44: #{tpu_custom_call.1} parent=5 // pred_fallthru
        _
      %p2347 = scmp.le.s32.totalorder 2, %s21
      // Predicated region
      $region61: #{tpu_custom_call.1} parent=5 // pred_check
        %p2348 = pneg %p2347
      $region62: #{tpu_custom_call.1} parent=5 // pred_check_branch
        %2350 = sbr.rel (%p2348) target = $region64
      $region63: #{tpu_custom_call.1} parent=5 // pred_region
        %s2351 = ssub.s32 %s21, 2
        // Predicated region
        $region65: #{tpu_custom_call.1} parent=63 // pred_check
          %p2352 = pneg %p186
        $region66: #{tpu_custom_call.1} parent=63 // pred_check_branch
          %2354 = sbr.rel (%p2352) target = $region68
        $region67: #{tpu_custom_call.1} parent=63 // pred_region
          %s2355 = sand.u32 %s171, 1
          %s2356 = scalar_lea.sflag [#allocation8], %s2355
          %s2357 = sand.u32 %s171, 1
          %s2358 = smul.addr %s2357, 64
          %s2359 = scalar_lea.vmem [#allocation12], %s2358
          %2360 = dma.done %s2356, 1024
        $region68: #{tpu_custom_call.1} parent=63 // pred_fallthru
          _
      $region64: #{tpu_custom_call.1} parent=5 // pred_fallthru
        _
    $region6: #{tpu_custom_call.1} parent=1 // loop_footer
      %s25 = sadd.s32 1, %s21
    $region7: #{tpu_custom_call.1} parent=1 // loop_footer_branch
      %20 = sbr.rel target = $region3
    $region8: #{tpu_custom_call.1} parent=1 // loop_exit
      _
    %2361 = vsyncpa [#allocation7], 1
    %s2362 = scalar_lea.sflag [#allocation7], 1
    %2363 = vsyncpa %s2362, 1
    %2364 = vsyncpa [#allocation10], 1
    %s2365 = scalar_lea.sflag [#allocation10], 1
    %2366 = vsyncpa %s2365, 1
    %2367 = vsyncpa [#allocation8], 1
    %s2368 = scalar_lea.sflag [#allocation8], 1
    %2369 = vsyncpa %s2368, 1

</llo_original>
